<compile_context>
chip_gen: v6e
topology: v6e:2x2x1
jax: 0.10.0
libtpu: 0.0.40
codegen_flags: <defaults>
</compile_context>

<pallas_src>
import jax
import jax.numpy as jnp
from jax import lax
from jax.experimental import pallas as pl
from jax.experimental.pallas import tpu as pltpu


# -----------------------------------------------------------------------------
# Pallas kernel: entire seq_len recurrence in one invocation.
# -----------------------------------------------------------------------------
def decoder_kernel(
    # inputs
    last_pos_rel_ref,   # (B, 4)
    last_img_ref,       # (B, E)
    dec_img_ref,        # (S, B, E)   whole decoder_img, VMEM resident
    h0_ref,             # (1, B, H)
    c0_ref,             # (1, B, H)
    w_sp_ref,           # (4, E)      spatial_embedding weight (input-major)
    b_sp_ref,           # (1, E)
    w_cat_ref,          # (E+H, 4H)   fused [w_ih; w_hh]   (gate order i,f,g,o)
    b_cat_ref,          # (1, 4H)     b_ih + b_hh
    w_out_ref,          # (H, 4+E)    [w_hp | w_hp @ w_sp] fused output proj
    b_out_ref,          # (1, 4+E)    [b_hp | b_hp @ w_sp + b_sp]
    # outputs
    pred_ref,           # (S, B, 4)   pred_traj_fake_rel
    hout_ref,           # (1, B, H)   final hidden state
):
    hdim = h0_ref.shape[-1]
    seq_len = pred_ref.shape[0]

    # Hoist all weight loads out of the recurrence (loaded once).
    w_cat = w_cat_ref[...]
    b_cat = b_cat_ref[...]
    w_out = w_out_ref[...]
    b_out = b_out_ref[...]

    # decoder_input = spatial_embedding(last_pos_rel) + last_img   (one time)
    x = (
        jnp.dot(last_pos_rel_ref[...], w_sp_ref[...],
                preferred_element_type=jnp.float32)
        + b_sp_ref[...]
        + last_img_ref[...]
    )
    h = h0_ref[0]
    c = c0_ref[0]

    # Fully unrolled recurrence (seq_len is small and static).
    rel_list = []
    for t in range(seq_len):
        # --- fused single-layer LSTM cell: one MXU push over [x | h] --------
        xh = jnp.concatenate([x, h], axis=-1)                    # (B, E+H)
        gates = jnp.dot(xh, w_cat, preferred_element_type=jnp.float32) + b_cat
        s = jax.nn.sigmoid(gates)            # one full-width EUP pass (i,f,_,o)
        i_g = s[:, 0 * hdim:1 * hdim]
        f_g = s[:, 1 * hdim:2 * hdim]
        o_g = s[:, 3 * hdim:4 * hdim]
        g_g = jnp.tanh(gates[:, 2 * hdim:3 * hdim])
        c = f_g * c + i_g * g_g
        h = o_g * jnp.tanh(c)

        # --- one fused projection: [rel_pos | next spatial embedding] -------
        proj = jnp.dot(h, w_out, preferred_element_type=jnp.float32) + b_out
        rel_list.append(proj[:, :4])                              # rel_pos
        x = proj[:, 4:] + dec_img_ref[t]                          # next input

    # Single writeback of the whole trajectory + final hidden state.
    pred_ref[...] = jnp.stack(rel_list, axis=0)
    hout_ref[0] = h


# -----------------------------------------------------------------------------
# Wrapper
# -----------------------------------------------------------------------------
def decoder_forward(last_pos, last_pos_rel, state_tuple, decoder_img, last_img,
                    params, *, seq_len):
    # last_pos only ever feeds curr_pos, which the original forward() never
    # returns -> dead input, dropped from the kernel.
    del last_pos
    h0, c0 = state_tuple
    batch = last_pos_rel.shape[0]
    hdim = h0.shape[-1]

    hp = jax.lax.Precision.HIGHEST
    # Fused LSTM weights (gate order i, f, g, o).
    w_cat = jnp.concatenate([params["w_ih"], params["w_hh"]], axis=0)
    b_cat = params["b_ih"] + params["b_hh"]
    # Fused [hidden2pos | hidden -> next spatial embedding] projection.
    w_x = jnp.dot(params["w_hp"], params["w_sp"], precision=hp)           # (H, E)
    b_x = jnp.dot(params["b_hp"], params["w_sp"], precision=hp) + params["b_sp"]
    w_out = jnp.concatenate([params["w_hp"], w_x], axis=1)                # (H, 4+E)
    b_out = jnp.concatenate([params["b_hp"], b_x], axis=1)                # (1, 4+E)

    vmem = lambda: pl.BlockSpec(memory_space=pltpu.MemorySpace.VMEM)
    n_in = 11

    pred, h_final = pl.pallas_call(
        decoder_kernel,
        out_shape=(
            jax.ShapeDtypeStruct((seq_len, batch, 4), jnp.float32),
            jax.ShapeDtypeStruct((1, batch, hdim), jnp.float32),
        ),
        in_specs=[vmem() for _ in range(n_in)],
        out_specs=(vmem(), vmem()),
    )(
        last_pos_rel, last_img, decoder_img, h0, c0,
        params["w_sp"], params["b_sp"],
        w_cat, b_cat,
        w_out, b_out,
    )
    return pred, h_final


# -----------------------------------------------------------------------------
# Pure-JAX reference (unfused, mirrors the PyTorch forward)
# -----------------------------------------------------------------------------
def decoder_forward_ref(last_pos, last_pos_rel, state_tuple, decoder_img,
                        last_img, params, *, seq_len):
    hp = jax.lax.Precision.HIGHEST
    hdim = state_tuple[0].shape[-1]
    h, c = state_tuple[0][0], state_tuple[1][0]
    x = (jnp.dot(last_pos_rel, params["w_sp"], precision=hp)
         + params["b_sp"] + last_img)
    preds = []
    for i in range(seq_len):
        gates = (jnp.dot(x, params["w_ih"], precision=hp) + params["b_ih"]
                 + jnp.dot(h, params["w_hh"], precision=hp) + params["b_hh"])
        i_g = jax.nn.sigmoid(gates[:, 0 * hdim:1 * hdim])
        f_g = jax.nn.sigmoid(gates[:, 1 * hdim:2 * hdim])
        g_g = jnp.tanh(gates[:, 2 * hdim:3 * hdim])
        o_g = jax.nn.sigmoid(gates[:, 3 * hdim:4 * hdim])
        c = f_g * c + i_g * g_g
        h = o_g * jnp.tanh(c)
        rel_pos = jnp.dot(h, params["w_hp"], precision=hp) + params["b_hp"]
        x = (jnp.dot(rel_pos, params["w_sp"], precision=hp)
             + params["b_sp"] + decoder_img[i])
        preds.append(rel_pos)
    return jnp.stack(preds, axis=0), h[None]


# -----------------------------------------------------------------------------
# Main
# -----------------------------------------------------------------------------
if __name__ == "__main__":
    SEQ_LEN = 8
    BATCH = 8
    EMBEDDING_DIM = 64   # matches decoder_img/last_img trailing dim in the spec
    H_DIM = 128
    NUM_LAYERS = 1

    key = jax.random.PRNGKey(0)
    keys = jax.random.split(key, 16)

    def rand(k, shape, scale=0.1):
        return (scale * jax.random.normal(k, shape)).astype(jnp.float32)

    # Synthetic parameters (shapes from Decoder.__init__).
    params = {
        # spatial_embedding: nn.Linear(4, embedding_dim)
        "w_sp": rand(keys[0], (4, EMBEDDING_DIM)),
        "b_sp": rand(keys[1], (1, EMBEDDING_DIM)),
        # decoder: nn.LSTM(embedding_dim, h_dim, 1)  (gate order i, f, g, o)
        "w_ih": rand(keys[2], (EMBEDDING_DIM, 4 * H_DIM)),
        "w_hh": rand(keys[3], (H_DIM, 4 * H_DIM)),
        "b_ih": rand(keys[4], (1, 4 * H_DIM)),
        "b_hh": rand(keys[5], (1, 4 * H_DIM)),
        # hidden2pos: nn.Linear(h_dim, 4)
        "w_hp": rand(keys[6], (H_DIM, 4)),
        "b_hp": rand(keys[7], (1, 4)),
    }
    # NOTE: self.time_embedding and self.mlp are constructed in __init__ but
    # never used in forward(), so they are intentionally omitted.

    # Inputs (obs_traj / obs_traj_rel / seq_start_end are unused by forward).
    last_pos = rand(keys[8], (BATCH, 4), scale=1.0)
    last_pos_rel = rand(keys[9], (BATCH, 4), scale=1.0)
    h0 = rand(keys[10], (NUM_LAYERS, BATCH, H_DIM), scale=0.5)
    c0 = rand(keys[11], (NUM_LAYERS, BATCH, H_DIM), scale=0.5)
    decoder_img = rand(keys[12], (SEQ_LEN, BATCH, EMBEDDING_DIM), scale=0.5)
    last_img = rand(keys[13], (BATCH, EMBEDDING_DIM), scale=0.5)

    pred, h_final = decoder_forward(
        last_pos, last_pos_rel, (h0, c0), decoder_img, last_img, params,
        seq_len=SEQ_LEN)
    pred = jax.block_until_ready(pred)
    h_final = jax.block_until_ready(h_final)

    pred_ref, h_ref = decoder_forward_ref(
        last_pos, last_pos_rel, (h0, c0), decoder_img, last_img, params,
        seq_len=SEQ_LEN)

    assert pred.shape == (SEQ_LEN, BATCH, 4)
    assert h_final.shape == (NUM_LAYERS, BATCH, H_DIM)
    assert jnp.allclose(pred, pred_ref, atol=1e-4, rtol=1e-4)
    assert jnp.allclose(h_final, h_ref, atol=1e-4, rtol=1e-4)

    print("KERNEL_OK")
</pallas_src>

<mosaic_0001>
module attributes {stable_mosaic.version = 11 : i64} {
  func.func @decoder_kernel(%arg0: memref<8x4xf32, #tpu.memory_space<vmem>>, %arg1: memref<8x64xf32, #tpu.memory_space<vmem>>, %arg2: memref<8x8x64xf32, #tpu.memory_space<vmem>>, %arg3: memref<1x8x128xf32, #tpu.memory_space<vmem>>, %arg4: memref<1x8x128xf32, #tpu.memory_space<vmem>>, %arg5: memref<4x64xf32, #tpu.memory_space<vmem>>, %arg6: memref<1x64xf32, #tpu.memory_space<vmem>>, %arg7: memref<192x512xf32, #tpu.memory_space<vmem>>, %arg8: memref<1x512xf32, #tpu.memory_space<vmem>>, %arg9: memref<128x68xf32, #tpu.memory_space<vmem>>, %arg10: memref<1x68xf32, #tpu.memory_space<vmem>>, %arg11: memref<8x8x4xf32, #tpu.memory_space<vmem>>, %arg12: memref<1x8x128xf32, #tpu.memory_space<vmem>>) attributes {dimension_semantics = [], scalar_prefetch = 0 : i64, scratch_operands = 0 : i64, tpu.core_type = #tpu.core_type<tc>} {
    %c0 = arith.constant 0 : index
    %c0_0 = arith.constant 0 : index
    %0 = vector.load %arg7[%c0, %c0_0] : memref<192x512xf32, #tpu.memory_space<vmem>>, vector<192x512xf32>
    %c0_1 = arith.constant 0 : index
    %c0_2 = arith.constant 0 : index
    %1 = vector.load %arg8[%c0_1, %c0_2] : memref<1x512xf32, #tpu.memory_space<vmem>>, vector<1x512xf32>
    %c0_3 = arith.constant 0 : index
    %c0_4 = arith.constant 0 : index
    %2 = vector.load %arg9[%c0_3, %c0_4] : memref<128x68xf32, #tpu.memory_space<vmem>>, vector<128x68xf32>
    %c0_5 = arith.constant 0 : index
    %c0_6 = arith.constant 0 : index
    %3 = vector.load %arg10[%c0_5, %c0_6] : memref<1x68xf32, #tpu.memory_space<vmem>>, vector<1x68xf32>
    %c0_7 = arith.constant 0 : index
    %c0_8 = arith.constant 0 : index
    %4 = vector.load %arg0[%c0_7, %c0_8] : memref<8x4xf32, #tpu.memory_space<vmem>>, vector<8x4xf32>
    %c0_9 = arith.constant 0 : index
    %c0_10 = arith.constant 0 : index
    %5 = vector.load %arg5[%c0_9, %c0_10] : memref<4x64xf32, #tpu.memory_space<vmem>>, vector<4x64xf32>
    %cst = arith.constant dense<0.000000e+00> : vector<8x64xf32>
    %6 = tpu.matmul %4, %5, %cst {dimension_numbers = #tpu.dot_dimension_numbers<[1], [0], [0], [1], [0, 0, 1, 1], [], []>} : vector<8x4xf32>, vector<4x64xf32>, vector<8x64xf32> -> vector<8x64xf32>
    %c0_11 = arith.constant 0 : index
    %c0_12 = arith.constant 0 : index
    %7 = vector.load %arg6[%c0_11, %c0_12] : memref<1x64xf32, #tpu.memory_space<vmem>>, vector<1x64xf32>
    %8 = vector.broadcast %7 : vector<1x64xf32> to vector<8x64xf32>
    %9 = arith.addf %6, %8 : vector<8x64xf32>
    %c0_13 = arith.constant 0 : index
    %c0_14 = arith.constant 0 : index
    %10 = vector.load %arg1[%c0_13, %c0_14] : memref<8x64xf32, #tpu.memory_space<vmem>>, vector<8x64xf32>
    %11 = arith.addf %9, %10 : vector<8x64xf32>
    %c0_15 = arith.constant 0 : index
    %c0_16 = arith.constant 0 : index
    %c0_17 = arith.constant 0 : index
    %12 = vector.load %arg3[%c0_15, %c0_16, %c0_17] : memref<1x8x128xf32, #tpu.memory_space<vmem>>, vector<1x8x128xf32>
    %13 = vector.shape_cast %12 : vector<1x8x128xf32> to vector<8x128xf32>
    %c0_18 = arith.constant 0 : index
    %c0_19 = arith.constant 0 : index
    %c0_20 = arith.constant 0 : index
    %14 = vector.load %arg4[%c0_18, %c0_19, %c0_20] : memref<1x8x128xf32, #tpu.memory_space<vmem>>, vector<1x8x128xf32>
    %15 = vector.shape_cast %14 : vector<1x8x128xf32> to vector<8x128xf32>
    %16 = tpu.concatenate %11, %13 in 1 : vector<8x64xf32>, vector<8x128xf32> -> vector<8x192xf32>
    %cst_21 = arith.constant dense<0.000000e+00> : vector<8x512xf32>
    %17 = tpu.matmul %16, %0, %cst_21 {dimension_numbers = #tpu.dot_dimension_numbers<[1], [0], [0], [1], [0, 0, 1, 1], [], []>} : vector<8x192xf32>, vector<192x512xf32>, vector<8x512xf32> -> vector<8x512xf32>
    %18 = vector.broadcast %1 : vector<1x512xf32> to vector<8x512xf32>
    %19 = arith.addf %17, %18 : vector<8x512xf32>
    %20 = arith.negf %19 : vector<8x512xf32>
    %21 = math.exp %20 : vector<8x512xf32>
    %cst_22 = arith.constant 1.000000e+00 : f32
    %22 = vector.broadcast %cst_22 : f32 to vector<8x512xf32>
    %23 = arith.addf %22, %21 : vector<8x512xf32>
    %24 = arith.divf %22, %23 : vector<8x512xf32>
    %25 = vector.extract_strided_slice %24 {offsets = [0, 0], sizes = [8, 128], strides = [1, 1]} : vector<8x512xf32> to vector<8x128xf32>
    %26 = vector.extract_strided_slice %24 {offsets = [0, 128], sizes = [8, 128], strides = [1, 1]} : vector<8x512xf32> to vector<8x128xf32>
    %27 = vector.extract_strided_slice %24 {offsets = [0, 384], sizes = [8, 128], strides = [1, 1]} : vector<8x512xf32> to vector<8x128xf32>
    %28 = vector.extract_strided_slice %19 {offsets = [0, 256], sizes = [8, 128], strides = [1, 1]} : vector<8x512xf32> to vector<8x128xf32>
    %29 = math.tanh %28 : vector<8x128xf32>
    %30 = arith.mulf %26, %15 : vector<8x128xf32>
    %31 = arith.mulf %25, %29 : vector<8x128xf32>
    %32 = arith.addf %30, %31 : vector<8x128xf32>
    %33 = math.tanh %32 : vector<8x128xf32>
    %34 = arith.mulf %27, %33 : vector<8x128xf32>
    %cst_23 = arith.constant dense<0.000000e+00> : vector<8x68xf32>
    %35 = tpu.matmul %34, %2, %cst_23 {dimension_numbers = #tpu.dot_dimension_numbers<[1], [0], [0], [1], [0, 0, 1, 1], [], []>} : vector<8x128xf32>, vector<128x68xf32>, vector<8x68xf32> -> vector<8x68xf32>
    %36 = vector.broadcast %3 : vector<1x68xf32> to vector<8x68xf32>
    %37 = arith.addf %35, %36 : vector<8x68xf32>
    %38 = vector.extract_strided_slice %37 {offsets = [0, 0], sizes = [8, 4], strides = [1, 1]} : vector<8x68xf32> to vector<8x4xf32>
    %39 = vector.extract_strided_slice %37 {offsets = [0, 4], sizes = [8, 64], strides = [1, 1]} : vector<8x68xf32> to vector<8x64xf32>
    %c0_24 = arith.constant 0 : index
    %c0_25 = arith.constant 0 : index
    %c0_26 = arith.constant 0 : index
    %40 = vector.load %arg2[%c0_24, %c0_25, %c0_26] : memref<8x8x64xf32, #tpu.memory_space<vmem>>, vector<1x8x64xf32>
    %41 = vector.shape_cast %40 : vector<1x8x64xf32> to vector<8x64xf32>
    %42 = arith.addf %39, %41 : vector<8x64xf32>
    %43 = tpu.concatenate %42, %34 in 1 : vector<8x64xf32>, vector<8x128xf32> -> vector<8x192xf32>
    %cst_27 = arith.constant dense<0.000000e+00> : vector<8x512xf32>
    %44 = tpu.matmul %43, %0, %cst_27 {dimension_numbers = #tpu.dot_dimension_numbers<[1], [0], [0], [1], [0, 0, 1, 1], [], []>} : vector<8x192xf32>, vector<192x512xf32>, vector<8x512xf32> -> vector<8x512xf32>
    %45 = vector.broadcast %1 : vector<1x512xf32> to vector<8x512xf32>
    %46 = arith.addf %44, %45 : vector<8x512xf32>
    %47 = arith.negf %46 : vector<8x512xf32>
    %48 = math.exp %47 : vector<8x512xf32>
    %cst_28 = arith.constant 1.000000e+00 : f32
    %49 = vector.broadcast %cst_28 : f32 to vector<8x512xf32>
    %50 = arith.addf %49, %48 : vector<8x512xf32>
    %51 = arith.divf %49, %50 : vector<8x512xf32>
    %52 = vector.extract_strided_slice %51 {offsets = [0, 0], sizes = [8, 128], strides = [1, 1]} : vector<8x512xf32> to vector<8x128xf32>
    %53 = vector.extract_strided_slice %51 {offsets = [0, 128], sizes = [8, 128], strides = [1, 1]} : vector<8x512xf32> to vector<8x128xf32>
    %54 = vector.extract_strided_slice %51 {offsets = [0, 384], sizes = [8, 128], strides = [1, 1]} : vector<8x512xf32> to vector<8x128xf32>
    %55 = vector.extract_strided_slice %46 {offsets = [0, 256], sizes = [8, 128], strides = [1, 1]} : vector<8x512xf32> to vector<8x128xf32>
    %56 = math.tanh %55 : vector<8x128xf32>
    %57 = arith.mulf %53, %32 : vector<8x128xf32>
    %58 = arith.mulf %52, %56 : vector<8x128xf32>
    %59 = arith.addf %57, %58 : vector<8x128xf32>
    %60 = math.tanh %59 : vector<8x128xf32>
    %61 = arith.mulf %54, %60 : vector<8x128xf32>
    %cst_29 = arith.constant dense<0.000000e+00> : vector<8x68xf32>
    %62 = tpu.matmul %61, %2, %cst_29 {dimension_numbers = #tpu.dot_dimension_numbers<[1], [0], [0], [1], [0, 0, 1, 1], [], []>} : vector<8x128xf32>, vector<128x68xf32>, vector<8x68xf32> -> vector<8x68xf32>
    %63 = vector.broadcast %3 : vector<1x68xf32> to vector<8x68xf32>
    %64 = arith.addf %62, %63 : vector<8x68xf32>
    %65 = vector.extract_strided_slice %64 {offsets = [0, 0], sizes = [8, 4], strides = [1, 1]} : vector<8x68xf32> to vector<8x4xf32>
    %66 = vector.extract_strided_slice %64 {offsets = [0, 4], sizes = [8, 64], strides = [1, 1]} : vector<8x68xf32> to vector<8x64xf32>
    %c1 = arith.constant 1 : index
    %c0_30 = arith.constant 0 : index
    %c0_31 = arith.constant 0 : index
    %67 = vector.load %arg2[%c1, %c0_30, %c0_31] : memref<8x8x64xf32, #tpu.memory_space<vmem>>, vector<1x8x64xf32>
    %68 = vector.shape_cast %67 : vector<1x8x64xf32> to vector<8x64xf32>
    %69 = arith.addf %66, %68 : vector<8x64xf32>
    %70 = tpu.concatenate %69, %61 in 1 : vector<8x64xf32>, vector<8x128xf32> -> vector<8x192xf32>
    %cst_32 = arith.constant dense<0.000000e+00> : vector<8x512xf32>
    %71 = tpu.matmul %70, %0, %cst_32 {dimension_numbers = #tpu.dot_dimension_numbers<[1], [0], [0], [1], [0, 0, 1, 1], [], []>} : vector<8x192xf32>, vector<192x512xf32>, vector<8x512xf32> -> vector<8x512xf32>
    %72 = vector.broadcast %1 : vector<1x512xf32> to vector<8x512xf32>
    %73 = arith.addf %71, %72 : vector<8x512xf32>
    %74 = arith.negf %73 : vector<8x512xf32>
    %75 = math.exp %74 : vector<8x512xf32>
    %cst_33 = arith.constant 1.000000e+00 : f32
    %76 = vector.broadcast %cst_33 : f32 to vector<8x512xf32>
    %77 = arith.addf %76, %75 : vector<8x512xf32>
    %78 = arith.divf %76, %77 : vector<8x512xf32>
    %79 = vector.extract_strided_slice %78 {offsets = [0, 0], sizes = [8, 128], strides = [1, 1]} : vector<8x512xf32> to vector<8x128xf32>
    %80 = vector.extract_strided_slice %78 {offsets = [0, 128], sizes = [8, 128], strides = [1, 1]} : vector<8x512xf32> to vector<8x128xf32>
    %81 = vector.extract_strided_slice %78 {offsets = [0, 384], sizes = [8, 128], strides = [1, 1]} : vector<8x512xf32> to vector<8x128xf32>
    %82 = vector.extract_strided_slice %73 {offsets = [0, 256], sizes = [8, 128], strides = [1, 1]} : vector<8x512xf32> to vector<8x128xf32>
    %83 = math.tanh %82 : vector<8x128xf32>
    %84 = arith.mulf %80, %59 : vector<8x128xf32>
    %85 = arith.mulf %79, %83 : vector<8x128xf32>
    %86 = arith.addf %84, %85 : vector<8x128xf32>
    %87 = math.tanh %86 : vector<8x128xf32>
    %88 = arith.mulf %81, %87 : vector<8x128xf32>
    %cst_34 = arith.constant dense<0.000000e+00> : vector<8x68xf32>
    %89 = tpu.matmul %88, %2, %cst_34 {dimension_numbers = #tpu.dot_dimension_numbers<[1], [0], [0], [1], [0, 0, 1, 1], [], []>} : vector<8x128xf32>, vector<128x68xf32>, vector<8x68xf32> -> vector<8x68xf32>
    %90 = vector.broadcast %3 : vector<1x68xf32> to vector<8x68xf32>
    %91 = arith.addf %89, %90 : vector<8x68xf32>
    %92 = vector.extract_strided_slice %91 {offsets = [0, 0], sizes = [8, 4], strides = [1, 1]} : vector<8x68xf32> to vector<8x4xf32>
    %93 = vector.extract_strided_slice %91 {offsets = [0, 4], sizes = [8, 64], strides = [1, 1]} : vector<8x68xf32> to vector<8x64xf32>
    %c2 = arith.constant 2 : index
    %c0_35 = arith.constant 0 : index
    %c0_36 = arith.constant 0 : index
    %94 = vector.load %arg2[%c2, %c0_35, %c0_36] : memref<8x8x64xf32, #tpu.memory_space<vmem>>, vector<1x8x64xf32>
    %95 = vector.shape_cast %94 : vector<1x8x64xf32> to vector<8x64xf32>
    %96 = arith.addf %93, %95 : vector<8x64xf32>
    %97 = tpu.concatenate %96, %88 in 1 : vector<8x64xf32>, vector<8x128xf32> -> vector<8x192xf32>
    %cst_37 = arith.constant dense<0.000000e+00> : vector<8x512xf32>
    %98 = tpu.matmul %97, %0, %cst_37 {dimension_numbers = #tpu.dot_dimension_numbers<[1], [0], [0], [1], [0, 0, 1, 1], [], []>} : vector<8x192xf32>, vector<192x512xf32>, vector<8x512xf32> -> vector<8x512xf32>
    %99 = vector.broadcast %1 : vector<1x512xf32> to vector<8x512xf32>
    %100 = arith.addf %98, %99 : vector<8x512xf32>
    %101 = arith.negf %100 : vector<8x512xf32>
    %102 = math.exp %101 : vector<8x512xf32>
    %cst_38 = arith.constant 1.000000e+00 : f32
    %103 = vector.broadcast %cst_38 : f32 to vector<8x512xf32>
    %104 = arith.addf %103, %102 : vector<8x512xf32>
    %105 = arith.divf %103, %104 : vector<8x512xf32>
    %106 = vector.extract_strided_slice %105 {offsets = [0, 0], sizes = [8, 128], strides = [1, 1]} : vector<8x512xf32> to vector<8x128xf32>
    %107 = vector.extract_strided_slice %105 {offsets = [0, 128], sizes = [8, 128], strides = [1, 1]} : vector<8x512xf32> to vector<8x128xf32>
    %108 = vector.extract_strided_slice %105 {offsets = [0, 384], sizes = [8, 128], strides = [1, 1]} : vector<8x512xf32> to vector<8x128xf32>
    %109 = vector.extract_strided_slice %100 {offsets = [0, 256], sizes = [8, 128], strides = [1, 1]} : vector<8x512xf32> to vector<8x128xf32>
    %110 = math.tanh %109 : vector<8x128xf32>
    %111 = arith.mulf %107, %86 : vector<8x128xf32>
    %112 = arith.mulf %106, %110 : vector<8x128xf32>
    %113 = arith.addf %111, %112 : vector<8x128xf32>
    %114 = math.tanh %113 : vector<8x128xf32>
    %115 = arith.mulf %108, %114 : vector<8x128xf32>
    %cst_39 = arith.constant dense<0.000000e+00> : vector<8x68xf32>
    %116 = tpu.matmul %115, %2, %cst_39 {dimension_numbers = #tpu.dot_dimension_numbers<[1], [0], [0], [1], [0, 0, 1, 1], [], []>} : vector<8x128xf32>, vector<128x68xf32>, vector<8x68xf32> -> vector<8x68xf32>
    %117 = vector.broadcast %3 : vector<1x68xf32> to vector<8x68xf32>
    %118 = arith.addf %116, %117 : vector<8x68xf32>
    %119 = vector.extract_strided_slice %118 {offsets = [0, 0], sizes = [8, 4], strides = [1, 1]} : vector<8x68xf32> to vector<8x4xf32>
    %120 = vector.extract_strided_slice %118 {offsets = [0, 4], sizes = [8, 64], strides = [1, 1]} : vector<8x68xf32> to vector<8x64xf32>
    %c3 = arith.constant 3 : index
    %c0_40 = arith.constant 0 : index
    %c0_41 = arith.constant 0 : index
    %121 = vector.load %arg2[%c3, %c0_40, %c0_41] : memref<8x8x64xf32, #tpu.memory_space<vmem>>, vector<1x8x64xf32>
    %122 = vector.shape_cast %121 : vector<1x8x64xf32> to vector<8x64xf32>
    %123 = arith.addf %120, %122 : vector<8x64xf32>
    %124 = tpu.concatenate %123, %115 in 1 : vector<8x64xf32>, vector<8x128xf32> -> vector<8x192xf32>
    %cst_42 = arith.constant dense<0.000000e+00> : vector<8x512xf32>
    %125 = tpu.matmul %124, %0, %cst_42 {dimension_numbers = #tpu.dot_dimension_numbers<[1], [0], [0], [1], [0, 0, 1, 1], [], []>} : vector<8x192xf32>, vector<192x512xf32>, vector<8x512xf32> -> vector<8x512xf32>
    %126 = vector.broadcast %1 : vector<1x512xf32> to vector<8x512xf32>
    %127 = arith.addf %125, %126 : vector<8x512xf32>
    %128 = arith.negf %127 : vector<8x512xf32>
    %129 = math.exp %128 : vector<8x512xf32>
    %cst_43 = arith.constant 1.000000e+00 : f32
    %130 = vector.broadcast %cst_43 : f32 to vector<8x512xf32>
    %131 = arith.addf %130, %129 : vector<8x512xf32>
    %132 = arith.divf %130, %131 : vector<8x512xf32>
    %133 = vector.extract_strided_slice %132 {offsets = [0, 0], sizes = [8, 128], strides = [1, 1]} : vector<8x512xf32> to vector<8x128xf32>
    %134 = vector.extract_strided_slice %132 {offsets = [0, 128], sizes = [8, 128], strides = [1, 1]} : vector<8x512xf32> to vector<8x128xf32>
    %135 = vector.extract_strided_slice %132 {offsets = [0, 384], sizes = [8, 128], strides = [1, 1]} : vector<8x512xf32> to vector<8x128xf32>
    %136 = vector.extract_strided_slice %127 {offsets = [0, 256], sizes = [8, 128], strides = [1, 1]} : vector<8x512xf32> to vector<8x128xf32>
    %137 = math.tanh %136 : vector<8x128xf32>
    %138 = arith.mulf %134, %113 : vector<8x128xf32>
    %139 = arith.mulf %133, %137 : vector<8x128xf32>
    %140 = arith.addf %138, %139 : vector<8x128xf32>
    %141 = math.tanh %140 : vector<8x128xf32>
    %142 = arith.mulf %135, %141 : vector<8x128xf32>
    %cst_44 = arith.constant dense<0.000000e+00> : vector<8x68xf32>
    %143 = tpu.matmul %142, %2, %cst_44 {dimension_numbers = #tpu.dot_dimension_numbers<[1], [0], [0], [1], [0, 0, 1, 1], [], []>} : vector<8x128xf32>, vector<128x68xf32>, vector<8x68xf32> -> vector<8x68xf32>
    %144 = vector.broadcast %3 : vector<1x68xf32> to vector<8x68xf32>
    %145 = arith.addf %143, %144 : vector<8x68xf32>
    %146 = vector.extract_strided_slice %145 {offsets = [0, 0], sizes = [8, 4], strides = [1, 1]} : vector<8x68xf32> to vector<8x4xf32>
    %147 = vector.extract_strided_slice %145 {offsets = [0, 4], sizes = [8, 64], strides = [1, 1]} : vector<8x68xf32> to vector<8x64xf32>
    %c4 = arith.constant 4 : index
    %c0_45 = arith.constant 0 : index
    %c0_46 = arith.constant 0 : index
    %148 = vector.load %arg2[%c4, %c0_45, %c0_46] : memref<8x8x64xf32, #tpu.memory_space<vmem>>, vector<1x8x64xf32>
    %149 = vector.shape_cast %148 : vector<1x8x64xf32> to vector<8x64xf32>
    %150 = arith.addf %147, %149 : vector<8x64xf32>
    %151 = tpu.concatenate %150, %142 in 1 : vector<8x64xf32>, vector<8x128xf32> -> vector<8x192xf32>
    %cst_47 = arith.constant dense<0.000000e+00> : vector<8x512xf32>
    %152 = tpu.matmul %151, %0, %cst_47 {dimension_numbers = #tpu.dot_dimension_numbers<[1], [0], [0], [1], [0, 0, 1, 1], [], []>} : vector<8x192xf32>, vector<192x512xf32>, vector<8x512xf32> -> vector<8x512xf32>
    %153 = vector.broadcast %1 : vector<1x512xf32> to vector<8x512xf32>
    %154 = arith.addf %152, %153 : vector<8x512xf32>
    %155 = arith.negf %154 : vector<8x512xf32>
    %156 = math.exp %155 : vector<8x512xf32>
    %cst_48 = arith.constant 1.000000e+00 : f32
    %157 = vector.broadcast %cst_48 : f32 to vector<8x512xf32>
    %158 = arith.addf %157, %156 : vector<8x512xf32>
    %159 = arith.divf %157, %158 : vector<8x512xf32>
    %160 = vector.extract_strided_slice %159 {offsets = [0, 0], sizes = [8, 128], strides = [1, 1]} : vector<8x512xf32> to vector<8x128xf32>
    %161 = vector.extract_strided_slice %159 {offsets = [0, 128], sizes = [8, 128], strides = [1, 1]} : vector<8x512xf32> to vector<8x128xf32>
    %162 = vector.extract_strided_slice %159 {offsets = [0, 384], sizes = [8, 128], strides = [1, 1]} : vector<8x512xf32> to vector<8x128xf32>
    %163 = vector.extract_strided_slice %154 {offsets = [0, 256], sizes = [8, 128], strides = [1, 1]} : vector<8x512xf32> to vector<8x128xf32>
    %164 = math.tanh %163 : vector<8x128xf32>
    %165 = arith.mulf %161, %140 : vector<8x128xf32>
    %166 = arith.mulf %160, %164 : vector<8x128xf32>
    %167 = arith.addf %165, %166 : vector<8x128xf32>
    %168 = math.tanh %167 : vector<8x128xf32>
    %169 = arith.mulf %162, %168 : vector<8x128xf32>
    %cst_49 = arith.constant dense<0.000000e+00> : vector<8x68xf32>
    %170 = tpu.matmul %169, %2, %cst_49 {dimension_numbers = #tpu.dot_dimension_numbers<[1], [0], [0], [1], [0, 0, 1, 1], [], []>} : vector<8x128xf32>, vector<128x68xf32>, vector<8x68xf32> -> vector<8x68xf32>
    %171 = vector.broadcast %3 : vector<1x68xf32> to vector<8x68xf32>
    %172 = arith.addf %170, %171 : vector<8x68xf32>
    %173 = vector.extract_strided_slice %172 {offsets = [0, 0], sizes = [8, 4], strides = [1, 1]} : vector<8x68xf32> to vector<8x4xf32>
    %174 = vector.extract_strided_slice %172 {offsets = [0, 4], sizes = [8, 64], strides = [1, 1]} : vector<8x68xf32> to vector<8x64xf32>
    %c5 = arith.constant 5 : index
    %c0_50 = arith.constant 0 : index
    %c0_51 = arith.constant 0 : index
    %175 = vector.load %arg2[%c5, %c0_50, %c0_51] : memref<8x8x64xf32, #tpu.memory_space<vmem>>, vector<1x8x64xf32>
    %176 = vector.shape_cast %175 : vector<1x8x64xf32> to vector<8x64xf32>
    %177 = arith.addf %174, %176 : vector<8x64xf32>
    %178 = tpu.concatenate %177, %169 in 1 : vector<8x64xf32>, vector<8x128xf32> -> vector<8x192xf32>
    %cst_52 = arith.constant dense<0.000000e+00> : vector<8x512xf32>
    %179 = tpu.matmul %178, %0, %cst_52 {dimension_numbers = #tpu.dot_dimension_numbers<[1], [0], [0], [1], [0, 0, 1, 1], [], []>} : vector<8x192xf32>, vector<192x512xf32>, vector<8x512xf32> -> vector<8x512xf32>
    %180 = vector.broadcast %1 : vector<1x512xf32> to vector<8x512xf32>
    %181 = arith.addf %179, %180 : vector<8x512xf32>
    %182 = arith.negf %181 : vector<8x512xf32>
    %183 = math.exp %182 : vector<8x512xf32>
    %cst_53 = arith.constant 1.000000e+00 : f32
    %184 = vector.broadcast %cst_53 : f32 to vector<8x512xf32>
    %185 = arith.addf %184, %183 : vector<8x512xf32>
    %186 = arith.divf %184, %185 : vector<8x512xf32>
    %187 = vector.extract_strided_slice %186 {offsets = [0, 0], sizes = [8, 128], strides = [1, 1]} : vector<8x512xf32> to vector<8x128xf32>
    %188 = vector.extract_strided_slice %186 {offsets = [0, 128], sizes = [8, 128], strides = [1, 1]} : vector<8x512xf32> to vector<8x128xf32>
    %189 = vector.extract_strided_slice %186 {offsets = [0, 384], sizes = [8, 128], strides = [1, 1]} : vector<8x512xf32> to vector<8x128xf32>
    %190 = vector.extract_strided_slice %181 {offsets = [0, 256], sizes = [8, 128], strides = [1, 1]} : vector<8x512xf32> to vector<8x128xf32>
    %191 = math.tanh %190 : vector<8x128xf32>
    %192 = arith.mulf %188, %167 : vector<8x128xf32>
    %193 = arith.mulf %187, %191 : vector<8x128xf32>
    %194 = arith.addf %192, %193 : vector<8x128xf32>
    %195 = math.tanh %194 : vector<8x128xf32>
    %196 = arith.mulf %189, %195 : vector<8x128xf32>
    %cst_54 = arith.constant dense<0.000000e+00> : vector<8x68xf32>
    %197 = tpu.matmul %196, %2, %cst_54 {dimension_numbers = #tpu.dot_dimension_numbers<[1], [0], [0], [1], [0, 0, 1, 1], [], []>} : vector<8x128xf32>, vector<128x68xf32>, vector<8x68xf32> -> vector<8x68xf32>
    %198 = vector.broadcast %3 : vector<1x68xf32> to vector<8x68xf32>
    %199 = arith.addf %197, %198 : vector<8x68xf32>
    %200 = vector.extract_strided_slice %199 {offsets = [0, 0], sizes = [8, 4], strides = [1, 1]} : vector<8x68xf32> to vector<8x4xf32>
    %201 = vector.extract_strided_slice %199 {offsets = [0, 4], sizes = [8, 64], strides = [1, 1]} : vector<8x68xf32> to vector<8x64xf32>
    %c6 = arith.constant 6 : index
    %c0_55 = arith.constant 0 : index
    %c0_56 = arith.constant 0 : index
    %202 = vector.load %arg2[%c6, %c0_55, %c0_56] : memref<8x8x64xf32, #tpu.memory_space<vmem>>, vector<1x8x64xf32>
    %203 = vector.shape_cast %202 : vector<1x8x64xf32> to vector<8x64xf32>
    %204 = arith.addf %201, %203 : vector<8x64xf32>
    %205 = tpu.concatenate %204, %196 in 1 : vector<8x64xf32>, vector<8x128xf32> -> vector<8x192xf32>
    %cst_57 = arith.constant dense<0.000000e+00> : vector<8x512xf32>
    %206 = tpu.matmul %205, %0, %cst_57 {dimension_numbers = #tpu.dot_dimension_numbers<[1], [0], [0], [1], [0, 0, 1, 1], [], []>} : vector<8x192xf32>, vector<192x512xf32>, vector<8x512xf32> -> vector<8x512xf32>
    %207 = vector.broadcast %1 : vector<1x512xf32> to vector<8x512xf32>
    %208 = arith.addf %206, %207 : vector<8x512xf32>
    %209 = arith.negf %208 : vector<8x512xf32>
    %210 = math.exp %209 : vector<8x512xf32>
    %cst_58 = arith.constant 1.000000e+00 : f32
    %211 = vector.broadcast %cst_58 : f32 to vector<8x512xf32>
    %212 = arith.addf %211, %210 : vector<8x512xf32>
    %213 = arith.divf %211, %212 : vector<8x512xf32>
    %214 = vector.extract_strided_slice %213 {offsets = [0, 0], sizes = [8, 128], strides = [1, 1]} : vector<8x512xf32> to vector<8x128xf32>
    %215 = vector.extract_strided_slice %213 {offsets = [0, 128], sizes = [8, 128], strides = [1, 1]} : vector<8x512xf32> to vector<8x128xf32>
    %216 = vector.extract_strided_slice %213 {offsets = [0, 384], sizes = [8, 128], strides = [1, 1]} : vector<8x512xf32> to vector<8x128xf32>
    %217 = vector.extract_strided_slice %208 {offsets = [0, 256], sizes = [8, 128], strides = [1, 1]} : vector<8x512xf32> to vector<8x128xf32>
    %218 = math.tanh %217 : vector<8x128xf32>
    %219 = arith.mulf %215, %194 : vector<8x128xf32>
    %220 = arith.mulf %214, %218 : vector<8x128xf32>
    %221 = arith.addf %219, %220 : vector<8x128xf32>
    %222 = math.tanh %221 : vector<8x128xf32>
    %223 = arith.mulf %216, %222 : vector<8x128xf32>
    %cst_59 = arith.constant dense<0.000000e+00> : vector<8x68xf32>
    %224 = tpu.matmul %223, %2, %cst_59 {dimension_numbers = #tpu.dot_dimension_numbers<[1], [0], [0], [1], [0, 0, 1, 1], [], []>} : vector<8x128xf32>, vector<128x68xf32>, vector<8x68xf32> -> vector<8x68xf32>
    %225 = vector.broadcast %3 : vector<1x68xf32> to vector<8x68xf32>
    %226 = arith.addf %224, %225 : vector<8x68xf32>
    %227 = vector.extract_strided_slice %226 {offsets = [0, 0], sizes = [8, 4], strides = [1, 1]} : vector<8x68xf32> to vector<8x4xf32>
    %228 = vector.shape_cast %38 : vector<8x4xf32> to vector<1x8x4xf32>
    %229 = vector.shape_cast %65 : vector<8x4xf32> to vector<1x8x4xf32>
    %230 = vector.shape_cast %92 : vector<8x4xf32> to vector<1x8x4xf32>
    %231 = vector.shape_cast %119 : vector<8x4xf32> to vector<1x8x4xf32>
    %232 = vector.shape_cast %146 : vector<8x4xf32> to vector<1x8x4xf32>
    %233 = vector.shape_cast %173 : vector<8x4xf32> to vector<1x8x4xf32>
    %234 = vector.shape_cast %200 : vector<8x4xf32> to vector<1x8x4xf32>
    %235 = vector.shape_cast %227 : vector<8x4xf32> to vector<1x8x4xf32>
    %236 = tpu.concatenate %228, %229, %230, %231, %232, %233, %234, %235 in 0 : vector<1x8x4xf32>, vector<1x8x4xf32>, vector<1x8x4xf32>, vector<1x8x4xf32>, vector<1x8x4xf32>, vector<1x8x4xf32>, vector<1x8x4xf32>, vector<1x8x4xf32> -> vector<8x8x4xf32>
    %c0_60 = arith.constant 0 : index
    %c0_61 = arith.constant 0 : index
    %c0_62 = arith.constant 0 : index
    %237 = vector.load %arg11[%c0_60, %c0_61, %c0_62] : memref<8x8x4xf32, #tpu.memory_space<vmem>>, vector<8x8x4xf32>
    tpu.vector_store %arg11[%c0_60, %c0_61, %c0_62], %236 {strides = array<i32>} : memref<8x8x4xf32, #tpu.memory_space<vmem>>, vector<8x8x4xf32>,
    %c0_63 = arith.constant 0 : index
    %c0_64 = arith.constant 0 : index
    %c0_65 = arith.constant 0 : index
    %238 = vector.load %arg12[%c0_63, %c0_64, %c0_65] : memref<1x8x128xf32, #tpu.memory_space<vmem>>, vector<1x8x128xf32>
    %239 = vector.shape_cast %238 : vector<1x8x128xf32> to vector<8x128xf32>
    %240 = vector.shape_cast %223 : vector<8x128xf32> to vector<1x8x128xf32>
    tpu.vector_store %arg12[%c0_63, %c0_64, %c0_65], %240 {strides = array<i32>} : memref<1x8x128xf32, #tpu.memory_space<vmem>>, vector<1x8x128xf32>,
    return
  }
}

</mosaic_0001>

<llo_original>
// kernel: tpu_custom_call.1
$region0: #{tpu_custom_call.1}
  #allocation0 [shape = 'u32[]', space=smem, size = 0x4, offset = 0x4, fixed_abs, tag = 'smem constant byte address 0x4 - core index']
  #allocation1 [shape = 'u32[144,128]{1,0:T(1,128)}', space=vmem, size = 0x12000, scoped, tag = 'internal scratch']
  %s0 = inlined_call_operand.vmem [shape: f32[8,4], index: 0, kind: input, shape index: {}]
  %s1 = inlined_call_operand.vmem [shape: f32[8,64], index: 1, kind: input, shape index: {}]
  %s2 = inlined_call_operand.vmem [shape: f32[8,8,64], index: 2, kind: input, shape index: {}]
  %s3 = inlined_call_operand.vmem [shape: f32[1,8,128], index: 3, kind: input, shape index: {}]
  %s4 = inlined_call_operand.vmem [shape: f32[1,8,128], index: 4, kind: input, shape index: {}]
  %s5 = inlined_call_operand.vmem [shape: f32[4,64], index: 5, kind: input, shape index: {}]
  %s6 = inlined_call_operand.vmem [shape: f32[1,64], index: 6, kind: input, shape index: {}]
  %s7 = inlined_call_operand.hbm [shape: f32[192,512], index: 7, kind: input, shape index: {}]
  %s8 = inlined_call_operand.vmem [shape: f32[1,512], index: 8, kind: input, shape index: {}]
  %s9 = inlined_call_operand.vmem [shape: f32[128,68], index: 9, kind: input, shape index: {}]
  %s10 = inlined_call_operand.vmem [shape: f32[1,68], index: 10, kind: input, shape index: {}]
  %s11 = inlined_call_operand.vmem [shape: f32[8,8,4], index: 11, kind: output, shape index: {0}]
  %s12 = inlined_call_operand.hbm [shape: f32[1,8,128], index: 12, kind: output, shape index: {1}]
  %13 = xla_tuple %s11, %s12
  %s14 = sld [smem:[#allocation0]]
  $region66: #{tpu_custom_call.1} parent=0
    _
  %s16 = ssub.s32 1, %s14
  %s17 = scalar_select 0, %s16, %s14
  $region1: #{tpu_custom_call.1} parent=0
    #allocation2 [shape = 'u8[393216]{0}', space=vmem, size = 0x60000, scoped, tag = 'input window, operand 7, single buffered']
    #allocation3 [shape = 's32[1]{0}', space=sflag, size = 0x4, scoped, tag = 'scoped memory for tpu_custom_call.1']
    #allocation4 [shape = 's32[1]{0}', space=sflag, size = 0x4, scoped, tag = 'scoped memory for tpu_custom_call.1']
    #allocation5 [shape = 'u8[4096]{0}', space=vmem, size = 0x1000, scoped, tag = 'output window, operand 1, single buffered']
    %18 = vsyncpa [#allocation3], 0
    %19 = vsyncpa [#allocation4], 0
    // Predicated region
    $region2: #{tpu_custom_call.1} parent=1 // pred_check
      _
    $region3: #{tpu_custom_call.1} parent=1 // pred_check_branch
      %21 = sbr.rel (0) target = $region5
    $region4: #{tpu_custom_call.1} parent=1 // pred_region
      _
    $region5: #{tpu_custom_call.1} parent=1 // pred_fallthru
      _
    // Predicated region
    $region6: #{tpu_custom_call.1} parent=1 // pred_check
      _
    $region7: #{tpu_custom_call.1} parent=1 // pred_check_branch
      %23 = sbr.rel (0) target = $region9
    $region8: #{tpu_custom_call.1} parent=1 // pred_region
      _
    $region9: #{tpu_custom_call.1} parent=1 // pred_fallthru
      _
    // Predicated region
    $region10: #{tpu_custom_call.1} parent=1 // pred_check
      _
    $region11: #{tpu_custom_call.1} parent=1 // pred_check_branch
      %25 = sbr.rel (0) target = $region13
    $region12: #{tpu_custom_call.1} parent=1 // pred_region
      _
    $region13: #{tpu_custom_call.1} parent=1 // pred_fallthru
      _
    // Predicated region
    $region14: #{tpu_custom_call.1} parent=1 // pred_check
      _
    $region15: #{tpu_custom_call.1} parent=1 // pred_check_branch
      %27 = sbr.rel (0) target = $region17
    $region16: #{tpu_custom_call.1} parent=1 // pred_region
      _
    $region17: #{tpu_custom_call.1} parent=1 // pred_fallthru
      _
    // Predicated region
    $region18: #{tpu_custom_call.1} parent=1 // pred_check
      _
    $region19: #{tpu_custom_call.1} parent=1 // pred_check_branch
      %29 = sbr.rel (0) target = $region21
    $region20: #{tpu_custom_call.1} parent=1 // pred_region
      _
    $region21: #{tpu_custom_call.1} parent=1 // pred_fallthru
      _
    // Predicated region
    $region22: #{tpu_custom_call.1} parent=1 // pred_check
      _
    $region23: #{tpu_custom_call.1} parent=1 // pred_check_branch
      %31 = sbr.rel (0) target = $region25
    $region24: #{tpu_custom_call.1} parent=1 // pred_region
      _
    $region25: #{tpu_custom_call.1} parent=1 // pred_fallthru
      _
    // Predicated region
    $region26: #{tpu_custom_call.1} parent=1 // pred_check
      _
    $region27: #{tpu_custom_call.1} parent=1 // pred_check_branch
      %33 = sbr.rel (0) target = $region29
    $region28: #{tpu_custom_call.1} parent=1 // pred_region
      _
    $region29: #{tpu_custom_call.1} parent=1 // pred_fallthru
      _
    // Predicated region
    $region30: #{tpu_custom_call.1} parent=1 // pred_check
      _
    $region31: #{tpu_custom_call.1} parent=1 // pred_check_branch
      %35 = sbr.rel (0) target = $region33
    $region32: #{tpu_custom_call.1} parent=1 // pred_region
      %s37 = ssub.s32 12288, 12288
      %38 = vsyncadd [#allocation3], %s37
      %s39 = sshll.u32 [#allocation2], 4
      %s40 = int_to_ptr.vmem [resolvable:$true] %s39
      %45 = dma.hbm_to_vmem [thread:$0]  %s7, 12288, %s40, [#allocation3], 512, 512, 32
    $region33: #{tpu_custom_call.1} parent=1 // pred_fallthru
      _
    // Predicated region
    $region34: #{tpu_custom_call.1} parent=1 // pred_check
      _
    $region35: #{tpu_custom_call.1} parent=1 // pred_check_branch
      %47 = sbr.rel (0) target = $region37
    $region36: #{tpu_custom_call.1} parent=1 // pred_region
      _
    $region37: #{tpu_custom_call.1} parent=1 // pred_fallthru
      _
    // Predicated region
    $region38: #{tpu_custom_call.1} parent=1 // pred_check
      _
    $region39: #{tpu_custom_call.1} parent=1 // pred_check_branch
      %49 = sbr.rel (0) target = $region41
    $region40: #{tpu_custom_call.1} parent=1 // pred_region
      _
    $region41: #{tpu_custom_call.1} parent=1 // pred_fallthru
      _
    // Predicated region
    $region42: #{tpu_custom_call.1} parent=1 // pred_check
      _
    $region43: #{tpu_custom_call.1} parent=1 // pred_check_branch
      %51 = sbr.rel (0) target = $region45
    $region44: #{tpu_custom_call.1} parent=1 // pred_region
      _
    $region45: #{tpu_custom_call.1} parent=1 // pred_fallthru
      _
    // Predicated region
    $region46: #{tpu_custom_call.1} parent=1 // pred_check
      _
    $region47: #{tpu_custom_call.1} parent=1 // pred_check_branch
      %53 = sbr.rel (0) target = $region49
    $region48: #{tpu_custom_call.1} parent=1 // pred_region
      %54 = dma.done [#allocation3], 12288
    $region49: #{tpu_custom_call.1} parent=1 // pred_fallthru
      _
    %v55 = vld [vmem:[#allocation2] sm:$0xff]
    %v56 = vld [vmem:[#allocation2 + $0x8] sm:$0xff]
    %v57 = vld [vmem:[#allocation2 + $0x10] sm:$0xff]
    %v58 = vld [vmem:[#allocation2 + $0x18] sm:$0xff]
    %v59 = vld [vmem:[#allocation2 + $0x20] sm:$0xff]
    %v60 = vld [vmem:[#allocation2 + $0x28] sm:$0xff]
    %v61 = vld [vmem:[#allocation2 + $0x30] sm:$0xff]
    %v62 = vld [vmem:[#allocation2 + $0x38] sm:$0xff]
    %v63 = vld [vmem:[#allocation2 + $0x40] sm:$0xff]
    %v64 = vld [vmem:[#allocation2 + $0x48] sm:$0xff]
    %v65 = vld [vmem:[#allocation2 + $0x50] sm:$0xff]
    %v66 = vld [vmem:[#allocation2 + $0x58] sm:$0xff]
    %v67 = vld [vmem:[#allocation2 + $0x60] sm:$0xff]
    %v68 = vld [vmem:[#allocation2 + $0x68] sm:$0xff]
    %v69 = vld [vmem:[#allocation2 + $0x70] sm:$0xff]
    %v70 = vld [vmem:[#allocation2 + $0x78] sm:$0xff]
    %v71 = vld [vmem:[#allocation2 + $0x80] sm:$0xff]
    %v72 = vld [vmem:[#allocation2 + $0x88] sm:$0xff]
    %v73 = vld [vmem:[#allocation2 + $0x90] sm:$0xff]
    %v74 = vld [vmem:[#allocation2 + $0x98] sm:$0xff]
    %v75 = vld [vmem:[#allocation2 + $0xa0] sm:$0xff]
    %v76 = vld [vmem:[#allocation2 + $0xa8] sm:$0xff]
    %v77 = vld [vmem:[#allocation2 + $0xb0] sm:$0xff]
    %v78 = vld [vmem:[#allocation2 + $0xb8] sm:$0xff]
    %v79 = vld [vmem:[#allocation2 + $0xc0] sm:$0xff]
    %v80 = vld [vmem:[#allocation2 + $0xc8] sm:$0xff]
    %v81 = vld [vmem:[#allocation2 + $0xd0] sm:$0xff]
    %v82 = vld [vmem:[#allocation2 + $0xd8] sm:$0xff]
    %v83 = vld [vmem:[#allocation2 + $0xe0] sm:$0xff]
    %v84 = vld [vmem:[#allocation2 + $0xe8] sm:$0xff]
    %v85 = vld [vmem:[#allocation2 + $0xf0] sm:$0xff]
    %v86 = vld [vmem:[#allocation2 + $0xf8] sm:$0xff]
    %v87 = vld [vmem:[#allocation2 + $0x100] sm:$0xff]
    %v88 = vld [vmem:[#allocation2 + $0x108] sm:$0xff]
    %v89 = vld [vmem:[#allocation2 + $0x110] sm:$0xff]
    %v90 = vld [vmem:[#allocation2 + $0x118] sm:$0xff]
    %v91 = vld [vmem:[#allocation2 + $0x120] sm:$0xff]
    %v92 = vld [vmem:[#allocation2 + $0x128] sm:$0xff]
    %v93 = vld [vmem:[#allocation2 + $0x130] sm:$0xff]
    %v94 = vld [vmem:[#allocation2 + $0x138] sm:$0xff]
    %v95 = vld [vmem:[#allocation2 + $0x140] sm:$0xff]
    %v96 = vld [vmem:[#allocation2 + $0x148] sm:$0xff]
    %v97 = vld [vmem:[#allocation2 + $0x150] sm:$0xff]
    %v98 = vld [vmem:[#allocation2 + $0x158] sm:$0xff]
    %v99 = vld [vmem:[#allocation2 + $0x160] sm:$0xff]
    %v100 = vld [vmem:[#allocation2 + $0x168] sm:$0xff]
    %v101 = vld [vmem:[#allocation2 + $0x170] sm:$0xff]
    %v102 = vld [vmem:[#allocation2 + $0x178] sm:$0xff]
    %v103 = vld [vmem:[#allocation2 + $0x180] sm:$0xff]
    %v104 = vld [vmem:[#allocation2 + $0x188] sm:$0xff]
    %v105 = vld [vmem:[#allocation2 + $0x190] sm:$0xff]
    %v106 = vld [vmem:[#allocation2 + $0x198] sm:$0xff]
    %v107 = vld [vmem:[#allocation2 + $0x1a0] sm:$0xff]
    %v108 = vld [vmem:[#allocation2 + $0x1a8] sm:$0xff]
    %v109 = vld [vmem:[#allocation2 + $0x1b0] sm:$0xff]
    %v110 = vld [vmem:[#allocation2 + $0x1b8] sm:$0xff]
    %v111 = vld [vmem:[#allocation2 + $0x1c0] sm:$0xff]
    %v112 = vld [vmem:[#allocation2 + $0x1c8] sm:$0xff]
    %v113 = vld [vmem:[#allocation2 + $0x1d0] sm:$0xff]
    %v114 = vld [vmem:[#allocation2 + $0x1d8] sm:$0xff]
    %v115 = vld [vmem:[#allocation2 + $0x1e0] sm:$0xff]
    %v116 = vld [vmem:[#allocation2 + $0x1e8] sm:$0xff]
    %v117 = vld [vmem:[#allocation2 + $0x1f0] sm:$0xff]
    %v118 = vld [vmem:[#allocation2 + $0x1f8] sm:$0xff]
    %v119 = vld [vmem:[#allocation2 + $0x200] sm:$0xff]
    %v120 = vld [vmem:[#allocation2 + $0x208] sm:$0xff]
    %v121 = vld [vmem:[#allocation2 + $0x210] sm:$0xff]
    %v122 = vld [vmem:[#allocation2 + $0x218] sm:$0xff]
    %v123 = vld [vmem:[#allocation2 + $0x220] sm:$0xff]
    %v124 = vld [vmem:[#allocation2 + $0x228] sm:$0xff]
    %v125 = vld [vmem:[#allocation2 + $0x230] sm:$0xff]
    %v126 = vld [vmem:[#allocation2 + $0x238] sm:$0xff]
    %v127 = vld [vmem:[#allocation2 + $0x240] sm:$0xff]
    %v128 = vld [vmem:[#allocation2 + $0x248] sm:$0xff]
    %v129 = vld [vmem:[#allocation2 + $0x250] sm:$0xff]
    %v130 = vld [vmem:[#allocation2 + $0x258] sm:$0xff]
    %v131 = vld [vmem:[#allocation2 + $0x260] sm:$0xff]
    %v132 = vld [vmem:[#allocation2 + $0x268] sm:$0xff]
    %v133 = vld [vmem:[#allocation2 + $0x270] sm:$0xff]
    %v134 = vld [vmem:[#allocation2 + $0x278] sm:$0xff]
    %v135 = vld [vmem:[#allocation2 + $0x280] sm:$0xff]
    %v136 = vld [vmem:[#allocation2 + $0x288] sm:$0xff]
    %v137 = vld [vmem:[#allocation2 + $0x290] sm:$0xff]
    %v138 = vld [vmem:[#allocation2 + $0x298] sm:$0xff]
    %v139 = vld [vmem:[#allocation2 + $0x2a0] sm:$0xff]
    %v140 = vld [vmem:[#allocation2 + $0x2a8] sm:$0xff]
    %v141 = vld [vmem:[#allocation2 + $0x2b0] sm:$0xff]
    %v142 = vld [vmem:[#allocation2 + $0x2b8] sm:$0xff]
    %v143 = vld [vmem:[#allocation2 + $0x2c0] sm:$0xff]
    %v144 = vld [vmem:[#allocation2 + $0x2c8] sm:$0xff]
    %v145 = vld [vmem:[#allocation2 + $0x2d0] sm:$0xff]
    %v146 = vld [vmem:[#allocation2 + $0x2d8] sm:$0xff]
    %v147 = vld [vmem:[#allocation2 + $0x2e0] sm:$0xff]
    %v148 = vld [vmem:[#allocation2 + $0x2e8] sm:$0xff]
    %v149 = vld [vmem:[#allocation2 + $0x2f0] sm:$0xff]
    %v150 = vld [vmem:[#allocation2 + $0x2f8] sm:$0xff]
    %v151 = vld [vmem:[%s8] sm:$0xf]
    %v152 = vld [vmem:[%s9] sm:$0xff]
    %v153 = vld [vmem:[%s9 + $0x8] sm:$0xff]
    %v154 = vld [vmem:[%s9 + $0x10] sm:$0xff]
    %v155 = vld [vmem:[%s9 + $0x18] sm:$0xff]
    %v156 = vld [vmem:[%s9 + $0x20] sm:$0xff]
    %v157 = vld [vmem:[%s9 + $0x28] sm:$0xff]
    %v158 = vld [vmem:[%s9 + $0x30] sm:$0xff]
    %v159 = vld [vmem:[%s9 + $0x38] sm:$0xff]
    %v160 = vld [vmem:[%s9 + $0x40] sm:$0xff]
    %v161 = vld [vmem:[%s9 + $0x48] sm:$0xff]
    %v162 = vld [vmem:[%s9 + $0x50] sm:$0xff]
    %v163 = vld [vmem:[%s9 + $0x58] sm:$0xff]
    %v164 = vld [vmem:[%s9 + $0x60] sm:$0xff]
    %v165 = vld [vmem:[%s9 + $0x68] sm:$0xff]
    %v166 = vld [vmem:[%s9 + $0x70] sm:$0xff]
    %v167 = vld [vmem:[%s9 + $0x78] sm:$0xff]
    %v168 = vld [vmem:[%s10] sm:$0x1]
    %v169 = vld [vmem:[%s0] sm:$0xff]
    %v170 = vld [vmem:[%s5] sm:$0xf]
    %v171 = vld [vmem:[%s6] sm:$0x1]
    %v173 = vlaneseq
    %v174 = vshrl.u32 %v173, 7
    %v175 = vsub.s32 0, %v174
    %v176 = vrot.slane %v171, %v175
    %vm178 = vcmask 31744
    %v180 = vsel %vm178, %v169, 0
    %vm182 = vcmask 1043456
    %v184 = vsel %vm182, %v170, 0
    %186 = vmatprep.subr.mxu0 0.0
    %187 = vmatpush1.msra.mxu0 0.0
    %188 = vmatprep.subr.mxu0 0.0
    %189 = vmatpush1.msra.mxu0 0.0
    %190 = vmatprep.subr.mxu0 0.0
    %191 = vmatpush1.msra.mxu0 0.0
    %192 = vmatprep.subr.mxu0 0.0
    %193 = vmatpush1.msra.mxu0 0.0
    %194 = vmatprep.subr.mxu0 0.0
    %195 = vmatpush1.msra.mxu0 0.0
    %196 = vmatprep.subr.mxu0 0.0
    %197 = vmatpush1.msra.mxu0 0.0
    %198 = vmatprep.subr.mxu0 0.0
    %199 = vmatpush1.msra.mxu0 0.0
    %200 = vmatprep.subr.mxu0 0.0
    %201 = vmatpush1.msra.mxu0 0.0
    %202 = vmatprep.subr.mxu0 0.0
    %203 = vmatpush1.msra.mxu0 0.0
    %204 = vmatprep.subr.mxu0 0.0
    %205 = vmatpush1.msra.mxu0 0.0
    %206 = vmatprep.subr.mxu0 0.0
    %207 = vmatpush1.msra.mxu0 0.0
    %208 = vmatprep.subr.mxu0 0.0
    %209 = vmatpush1.msra.mxu0 0.0
    %210 = vmatprep.subr.mxu0 0.0
    %211 = vmatpush1.msra.mxu0 0.0
    %212 = vmatprep.subr.mxu0 0.0
    %213 = vmatpush1.msra.mxu0 0.0
    %214 = vmatprep.subr.mxu0 0.0
    %215 = vmatpush1.msra.mxu0 0.0
    %216 = vmatprep.subr.mxu0 0.0
    %217 = vmatpush1.msra.mxu0 %v184
    %218 = vmatprep.subr.mxu0 0.0
    %219 = vmatpush2.msra.mxu0 0.0
    %220 = vmatprep.subr.mxu0 0.0
    %221 = vmatpush2.msra.mxu0 0.0
    %222 = vmatprep.subr.mxu0 0.0
    %223 = vmatpush2.msra.mxu0 0.0
    %224 = vmatprep.subr.mxu0 0.0
    %225 = vmatpush2.msra.mxu0 0.0
    %226 = vmatprep.subr.mxu0 0.0
    %227 = vmatpush2.msra.mxu0 0.0
    %228 = vmatprep.subr.mxu0 0.0
    %229 = vmatpush2.msra.mxu0 0.0
    %230 = vmatprep.subr.mxu0 0.0
    %231 = vmatpush2.msra.mxu0 0.0
    %232 = vmatprep.subr.mxu0 0.0
    %233 = vmatpush2.msra.mxu0 0.0
    %234 = vmatprep.subr.mxu0 0.0
    %235 = vmatpush2.msra.mxu0 0.0
    %236 = vmatprep.subr.mxu0 0.0
    %237 = vmatpush2.msra.mxu0 0.0
    %238 = vmatprep.subr.mxu0 0.0
    %239 = vmatpush2.msra.mxu0 0.0
    %240 = vmatprep.subr.mxu0 0.0
    %241 = vmatpush2.msra.mxu0 0.0
    %242 = vmatprep.subr.mxu0 0.0
    %243 = vmatpush2.msra.mxu0 0.0
    %244 = vmatprep.subr.mxu0 0.0
    %245 = vmatpush2.msra.mxu0 0.0
    %246 = vmatprep.subr.mxu0 0.0
    %247 = vmatpush2.msra.mxu0 0.0
    %248 = vmatprep.subr.mxu0 0.0
    %249 = vmatpush2.msra.mxu0 0.0
    %250 = vmatprep.mubr.f32.mxu0 0.0
    %251 = vmatmul.mubr.f32.gmra.mxu0 %v180
    %v252 = vpop.f32.mrf.mxu0
    %v253 = vadd.f32 %v176, %v252
    %v254 = vpop.f32.mrf.mxu0
    %255 = vdwg.mxu0
    %v256 = vld [vmem:[%s1] sm:$0xff]
    %v257 = vadd.f32 %v253, %v256
    %v258 = vld [vmem:[%s3] sm:$0xff]
    %v259 = vld [vmem:[%s4] sm:$0xff]
    %261 = vrot.lane.b32.xlu0 %v258, 64
    %v262 = vpop.permute.xlu0 %261
    %vm264 = vcmask 523264
    %v265 = vsel %vm264, %v257, %v262
    %v267 = vlaneseq
    %v268 = vshrl.u32 %v267, 7
    %v269 = vsub.s32 0, %v268
    %v270 = vrot.slane %v151, %v269
    %v271 = vlaneseq
    %v272 = vshrl.u32 %v271, 7
    %v273 = vsub.s32 1, %v272
    %v274 = vrot.slane %v151, %v273
    %v275 = vlaneseq
    %v276 = vshrl.u32 %v275, 7
    %v277 = vsub.s32 2, %v276
    %v278 = vrot.slane %v151, %v277
    %v279 = vlaneseq
    %v280 = vshrl.u32 %v279, 7
    %v281 = vsub.s32 3, %v280
    %v282 = vrot.slane %v151, %v281
    %v287 = vsel %vm264, %v262, 0
    %289 = vmatprep.subr.mxu0 %v116
    %290 = vmatpush1.msra.mxu0 %v115
    %291 = vmatprep.subr.mxu0 %v112
    %292 = vmatpush1.msra.mxu0 %v111
    %293 = vmatprep.subr.mxu0 %v108
    %294 = vmatpush1.msra.mxu0 %v107
    %295 = vmatprep.subr.mxu0 %v104
    %296 = vmatpush1.msra.mxu0 %v103
    %297 = vmatprep.subr.mxu0 %v100
    %298 = vmatpush1.msra.mxu0 %v99
    %299 = vmatprep.subr.mxu0 %v96
    %300 = vmatpush1.msra.mxu0 %v95
    %301 = vmatprep.subr.mxu0 %v92
    %302 = vmatpush1.msra.mxu0 %v91
    %303 = vmatprep.subr.mxu0 %v88
    %304 = vmatpush1.msra.mxu0 %v87
    %305 = vmatprep.subr.mxu0 %v84
    %306 = vmatpush1.msra.mxu0 %v83
    %307 = vmatprep.subr.mxu0 %v80
    %308 = vmatpush1.msra.mxu0 %v79
    %309 = vmatprep.subr.mxu0 %v76
    %310 = vmatpush1.msra.mxu0 %v75
    %311 = vmatprep.subr.mxu0 %v72
    %312 = vmatpush1.msra.mxu0 %v71
    %313 = vmatprep.subr.mxu0 %v68
    %314 = vmatpush1.msra.mxu0 %v67
    %315 = vmatprep.subr.mxu0 %v64
    %316 = vmatpush1.msra.mxu0 %v63
    %317 = vmatprep.subr.mxu0 %v60
    %318 = vmatpush1.msra.mxu0 %v59
    %319 = vmatprep.subr.mxu0 %v56
    %320 = vmatpush1.msra.mxu0 %v55
    %321 = vmatprep.subr.mxu0 0.0
    %322 = vmatpush2.msra.mxu0 0.0
    %323 = vmatprep.subr.mxu0 0.0
    %324 = vmatpush2.msra.mxu0 0.0
    %325 = vmatprep.subr.mxu0 0.0
    %326 = vmatpush2.msra.mxu0 0.0
    %327 = vmatprep.subr.mxu0 0.0
    %328 = vmatpush2.msra.mxu0 0.0
    %329 = vmatprep.subr.mxu0 0.0
    %330 = vmatpush2.msra.mxu0 0.0
    %331 = vmatprep.subr.mxu0 0.0
    %332 = vmatpush2.msra.mxu0 0.0
    %333 = vmatprep.subr.mxu0 0.0
    %334 = vmatpush2.msra.mxu0 0.0
    %335 = vmatprep.subr.mxu0 0.0
    %336 = vmatpush2.msra.mxu0 0.0
    %337 = vmatprep.subr.mxu0 %v148
    %338 = vmatpush2.msra.mxu0 %v147
    %339 = vmatprep.subr.mxu0 %v144
    %340 = vmatpush2.msra.mxu0 %v143
    %341 = vmatprep.subr.mxu0 %v140
    %342 = vmatpush2.msra.mxu0 %v139
    %343 = vmatprep.subr.mxu0 %v136
    %344 = vmatpush2.msra.mxu0 %v135
    %345 = vmatprep.subr.mxu0 %v132
    %346 = vmatpush2.msra.mxu0 %v131
    %347 = vmatprep.subr.mxu0 %v128
    %348 = vmatpush2.msra.mxu0 %v127
    %349 = vmatprep.subr.mxu0 %v124
    %350 = vmatpush2.msra.mxu0 %v123
    %351 = vmatprep.subr.mxu0 %v120
    %352 = vmatpush2.msra.mxu0 %v119
    %353 = vmatprep.mubr.f32.mxu0 %v287
    %354 = vmatmul.mubr.f32.gmra.mxu0 %v265
    %v355 = vpop.f32.mrf.mxu0
    %v356 = vadd.f32 %v270, %v355
    %v357 = vpop.f32.mrf.mxu0
    %v358 = vadd.f32 %v274, %v357
    %359 = vdwg.mxu0
    %360 = vmatprep.subr.mxu0 %v118
    %361 = vmatpush1.msra.mxu0 %v117
    %362 = vmatprep.subr.mxu0 %v114
    %363 = vmatpush1.msra.mxu0 %v113
    %364 = vmatprep.subr.mxu0 %v110
    %365 = vmatpush1.msra.mxu0 %v109
    %366 = vmatprep.subr.mxu0 %v106
    %367 = vmatpush1.msra.mxu0 %v105
    %368 = vmatprep.subr.mxu0 %v102
    %369 = vmatpush1.msra.mxu0 %v101
    %370 = vmatprep.subr.mxu0 %v98
    %371 = vmatpush1.msra.mxu0 %v97
    %372 = vmatprep.subr.mxu0 %v94
    %373 = vmatpush1.msra.mxu0 %v93
    %374 = vmatprep.subr.mxu0 %v90
    %375 = vmatpush1.msra.mxu0 %v89
    %376 = vmatprep.subr.mxu0 %v86
    %377 = vmatpush1.msra.mxu0 %v85
    %378 = vmatprep.subr.mxu0 %v82
    %379 = vmatpush1.msra.mxu0 %v81
    %380 = vmatprep.subr.mxu0 %v78
    %381 = vmatpush1.msra.mxu0 %v77
    %382 = vmatprep.subr.mxu0 %v74
    %383 = vmatpush1.msra.mxu0 %v73
    %384 = vmatprep.subr.mxu0 %v70
    %385 = vmatpush1.msra.mxu0 %v69
    %386 = vmatprep.subr.mxu0 %v66
    %387 = vmatpush1.msra.mxu0 %v65
    %388 = vmatprep.subr.mxu0 %v62
    %389 = vmatpush1.msra.mxu0 %v61
    %390 = vmatprep.subr.mxu0 %v58
    %391 = vmatpush1.msra.mxu0 %v57
    %392 = vmatprep.subr.mxu0 0.0
    %393 = vmatpush2.msra.mxu0 0.0
    %394 = vmatprep.subr.mxu0 0.0
    %395 = vmatpush2.msra.mxu0 0.0
    %396 = vmatprep.subr.mxu0 0.0
    %397 = vmatpush2.msra.mxu0 0.0
    %398 = vmatprep.subr.mxu0 0.0
    %399 = vmatpush2.msra.mxu0 0.0
    %400 = vmatprep.subr.mxu0 0.0
    %401 = vmatpush2.msra.mxu0 0.0
    %402 = vmatprep.subr.mxu0 0.0
    %403 = vmatpush2.msra.mxu0 0.0
    %404 = vmatprep.subr.mxu0 0.0
    %405 = vmatpush2.msra.mxu0 0.0
    %406 = vmatprep.subr.mxu0 0.0
    %407 = vmatpush2.msra.mxu0 0.0
    %408 = vmatprep.subr.mxu0 %v150
    %409 = vmatpush2.msra.mxu0 %v149
    %410 = vmatprep.subr.mxu0 %v146
    %411 = vmatpush2.msra.mxu0 %v145
    %412 = vmatprep.subr.mxu0 %v142
    %413 = vmatpush2.msra.mxu0 %v141
    %414 = vmatprep.subr.mxu0 %v138
    %415 = vmatpush2.msra.mxu0 %v137
    %416 = vmatprep.subr.mxu0 %v134
    %417 = vmatpush2.msra.mxu0 %v133
    %418 = vmatprep.subr.mxu0 %v130
    %419 = vmatpush2.msra.mxu0 %v129
    %420 = vmatprep.subr.mxu0 %v126
    %421 = vmatpush2.msra.mxu0 %v125
    %422 = vmatprep.subr.mxu0 %v122
    %423 = vmatpush2.msra.mxu0 %v121
    %424 = vmatprep.mubr.f32.mxu0 %v287
    %425 = vmatmul.mubr.f32.gmra.mxu0 %v265
    %v426 = vpop.f32.mrf.mxu0
    %v427 = vadd.f32 %v278, %v426
    %v428 = vpop.f32.mrf.mxu0
    %v429 = vadd.f32 %v282, %v428
    %430 = vdwg.mxu0
    %v431 = vxor.u32 %v356, 2147483648
    %v432 = vxor.u32 %v358, 2147483648
    %v433 = vxor.u32 %v429, 2147483648
    %v434 = vmul.f32 %v431, 1.442695
    %v435 = vpow.pop %v434
    %v436 = vmul.f32 %v432, 1.442695
    %v437 = vpow.pop %v436
    %v438 = vmul.f32 %v433, 1.442695
    %v439 = vpow.pop %v438
    %v440 = vadd.f32 %v435, 1.0
    %v441 = vadd.f32 %v437, 1.0
    %v442 = vadd.f32 %v439, 1.0
    %v443 = vrcp.pop %v440
    %v444 = vmul.f32 1.0, %v443
    %v445 = vrcp.pop %v441
    %v446 = vmul.f32 1.0, %v445
    %v447 = vrcp.pop %v442
    %v448 = vmul.f32 1.0, %v447
    %v449 = vtanh.pop %v427
    %v450 = vmul.f32 %v446, %v259
    %v451 = vmul.f32 %v444, %v449
    %v452 = vadd.f32 %v450, %v451
    %v453 = vtanh.pop %v452
    %v454 = vmul.f32 %v448, %v453
    %v456 = vlaneseq
    %v457 = vshrl.u32 %v456, 7
    %v458 = vsub.s32 0, %v457
    %v459 = vrot.slane %v168, %v458
    %461 = vmatprep.subr.mxu0 0.0
    %462 = vmatpush1.msra.mxu0 %v167
    %463 = vmatprep.subr.mxu0 0.0
    %464 = vmatpush1.msra.mxu0 %v166
    %465 = vmatprep.subr.mxu0 0.0
    %466 = vmatpush1.msra.mxu0 %v165
    %467 = vmatprep.subr.mxu0 0.0
    %468 = vmatpush1.msra.mxu0 %v164
    %469 = vmatprep.subr.mxu0 0.0
    %470 = vmatpush1.msra.mxu0 %v163
    %471 = vmatprep.subr.mxu0 0.0
    %472 = vmatpush1.msra.mxu0 %v162
    %473 = vmatprep.subr.mxu0 0.0
    %474 = vmatpush1.msra.mxu0 %v161
    %475 = vmatprep.subr.mxu0 0.0
    %476 = vmatpush1.msra.mxu0 %v160
    %477 = vmatprep.subr.mxu0 0.0
    %478 = vmatpush1.msra.mxu0 %v159
    %479 = vmatprep.subr.mxu0 0.0
    %480 = vmatpush1.msra.mxu0 %v158
    %481 = vmatprep.subr.mxu0 0.0
    %482 = vmatpush1.msra.mxu0 %v157
    %483 = vmatprep.subr.mxu0 0.0
    %484 = vmatpush1.msra.mxu0 %v156
    %485 = vmatprep.subr.mxu0 0.0
    %486 = vmatpush1.msra.mxu0 %v155
    %487 = vmatprep.subr.mxu0 0.0
    %488 = vmatpush1.msra.mxu0 %v154
    %489 = vmatprep.subr.mxu0 0.0
    %490 = vmatpush1.msra.mxu0 %v153
    %491 = vmatprep.subr.mxu0 0.0
    %492 = vmatpush1.msra.mxu0 %v152
    %493 = vmatprep.subr.mxu0 0.0
    %494 = vmatpush2.msra.mxu0 0.0
    %495 = vmatprep.subr.mxu0 0.0
    %496 = vmatpush2.msra.mxu0 0.0
    %497 = vmatprep.subr.mxu0 0.0
    %498 = vmatpush2.msra.mxu0 0.0
    %499 = vmatprep.subr.mxu0 0.0
    %500 = vmatpush2.msra.mxu0 0.0
    %501 = vmatprep.subr.mxu0 0.0
    %502 = vmatpush2.msra.mxu0 0.0
    %503 = vmatprep.subr.mxu0 0.0
    %504 = vmatpush2.msra.mxu0 0.0
    %505 = vmatprep.subr.mxu0 0.0
    %506 = vmatpush2.msra.mxu0 0.0
    %507 = vmatprep.subr.mxu0 0.0
    %508 = vmatpush2.msra.mxu0 0.0
    %509 = vmatprep.subr.mxu0 0.0
    %510 = vmatpush2.msra.mxu0 0.0
    %511 = vmatprep.subr.mxu0 0.0
    %512 = vmatpush2.msra.mxu0 0.0
    %513 = vmatprep.subr.mxu0 0.0
    %514 = vmatpush2.msra.mxu0 0.0
    %515 = vmatprep.subr.mxu0 0.0
    %516 = vmatpush2.msra.mxu0 0.0
    %517 = vmatprep.subr.mxu0 0.0
    %518 = vmatpush2.msra.mxu0 0.0
    %519 = vmatprep.subr.mxu0 0.0
    %520 = vmatpush2.msra.mxu0 0.0
    %521 = vmatprep.subr.mxu0 0.0
    %522 = vmatpush2.msra.mxu0 0.0
    %523 = vmatprep.subr.mxu0 0.0
    %524 = vmatpush2.msra.mxu0 0.0
    %525 = vmatprep.mubr.f32.mxu0 0.0
    %526 = vmatmul.mubr.f32.gmra.mxu0 %v454
    %v527 = vpop.f32.mrf.mxu0
    %v528 = vadd.f32 %v459, %v527
    %v529 = vpop.f32.mrf.mxu0
    %530 = vdwg.mxu0
    %v531 = vld [vmem:[%s2] sm:$0xff]
    %533 = vrot.lane.b32.xlu0 %v531, 4
    %v534 = vpop.permute.xlu0 %533
    %v536 = vadd.f32 %v528, %v534
    %538 = vrot.lane.b32.xlu0 %v536, 124
    %v539 = vpop.permute.xlu0 %538
    %542 = vrot.lane.b32.xlu0 %v454, 64
    %v543 = vpop.permute.xlu0 %542
    %v545 = vsel %vm264, %v539, %v543
    %v546 = vsel %vm264, %v543, 0
    %548 = vmatprep.subr.mxu0 %v116
    %549 = vmatpush1.msra.mxu0 %v115
    %550 = vmatprep.subr.mxu0 %v112
    %551 = vmatpush1.msra.mxu0 %v111
    %552 = vmatprep.subr.mxu0 %v108
    %553 = vmatpush1.msra.mxu0 %v107
    %554 = vmatprep.subr.mxu0 %v104
    %555 = vmatpush1.msra.mxu0 %v103
    %556 = vmatprep.subr.mxu0 %v100
    %557 = vmatpush1.msra.mxu0 %v99
    %558 = vmatprep.subr.mxu0 %v96
    %559 = vmatpush1.msra.mxu0 %v95
    %560 = vmatprep.subr.mxu0 %v92
    %561 = vmatpush1.msra.mxu0 %v91
    %562 = vmatprep.subr.mxu0 %v88
    %563 = vmatpush1.msra.mxu0 %v87
    %564 = vmatprep.subr.mxu0 %v84
    %565 = vmatpush1.msra.mxu0 %v83
    %566 = vmatprep.subr.mxu0 %v80
    %567 = vmatpush1.msra.mxu0 %v79
    %568 = vmatprep.subr.mxu0 %v76
    %569 = vmatpush1.msra.mxu0 %v75
    %570 = vmatprep.subr.mxu0 %v72
    %571 = vmatpush1.msra.mxu0 %v71
    %572 = vmatprep.subr.mxu0 %v68
    %573 = vmatpush1.msra.mxu0 %v67
    %574 = vmatprep.subr.mxu0 %v64
    %575 = vmatpush1.msra.mxu0 %v63
    %576 = vmatprep.subr.mxu0 %v60
    %577 = vmatpush1.msra.mxu0 %v59
    %578 = vmatprep.subr.mxu0 %v56
    %579 = vmatpush1.msra.mxu0 %v55
    %580 = vmatprep.subr.mxu0 0.0
    %581 = vmatpush2.msra.mxu0 0.0
    %582 = vmatprep.subr.mxu0 0.0
    %583 = vmatpush2.msra.mxu0 0.0
    %584 = vmatprep.subr.mxu0 0.0
    %585 = vmatpush2.msra.mxu0 0.0
    %586 = vmatprep.subr.mxu0 0.0
    %587 = vmatpush2.msra.mxu0 0.0
    %588 = vmatprep.subr.mxu0 0.0
    %589 = vmatpush2.msra.mxu0 0.0
    %590 = vmatprep.subr.mxu0 0.0
    %591 = vmatpush2.msra.mxu0 0.0
    %592 = vmatprep.subr.mxu0 0.0
    %593 = vmatpush2.msra.mxu0 0.0
    %594 = vmatprep.subr.mxu0 0.0
    %595 = vmatpush2.msra.mxu0 0.0
    %596 = vmatprep.subr.mxu0 %v148
    %597 = vmatpush2.msra.mxu0 %v147
    %598 = vmatprep.subr.mxu0 %v144
    %599 = vmatpush2.msra.mxu0 %v143
    %600 = vmatprep.subr.mxu0 %v140
    %601 = vmatpush2.msra.mxu0 %v139
    %602 = vmatprep.subr.mxu0 %v136
    %603 = vmatpush2.msra.mxu0 %v135
    %604 = vmatprep.subr.mxu0 %v132
    %605 = vmatpush2.msra.mxu0 %v131
    %606 = vmatprep.subr.mxu0 %v128
    %607 = vmatpush2.msra.mxu0 %v127
    %608 = vmatprep.subr.mxu0 %v124
    %609 = vmatpush2.msra.mxu0 %v123
    %610 = vmatprep.subr.mxu0 %v120
    %611 = vmatpush2.msra.mxu0 %v119
    %612 = vmatprep.mubr.f32.mxu0 %v546
    %613 = vmatmul.mubr.f32.gmra.mxu0 %v545
    %v614 = vpop.f32.mrf.mxu0
    %v615 = vadd.f32 %v270, %v614
    %v616 = vpop.f32.mrf.mxu0
    %v617 = vadd.f32 %v274, %v616
    %618 = vdwg.mxu0
    %619 = vmatprep.subr.mxu0 %v118
    %620 = vmatpush1.msra.mxu0 %v117
    %621 = vmatprep.subr.mxu0 %v114
    %622 = vmatpush1.msra.mxu0 %v113
    %623 = vmatprep.subr.mxu0 %v110
    %624 = vmatpush1.msra.mxu0 %v109
    %625 = vmatprep.subr.mxu0 %v106
    %626 = vmatpush1.msra.mxu0 %v105
    %627 = vmatprep.subr.mxu0 %v102
    %628 = vmatpush1.msra.mxu0 %v101
    %629 = vmatprep.subr.mxu0 %v98
    %630 = vmatpush1.msra.mxu0 %v97
    %631 = vmatprep.subr.mxu0 %v94
    %632 = vmatpush1.msra.mxu0 %v93
    %633 = vmatprep.subr.mxu0 %v90
    %634 = vmatpush1.msra.mxu0 %v89
    %635 = vmatprep.subr.mxu0 %v86
    %636 = vmatpush1.msra.mxu0 %v85
    %637 = vmatprep.subr.mxu0 %v82
    %638 = vmatpush1.msra.mxu0 %v81
    %639 = vmatprep.subr.mxu0 %v78
    %640 = vmatpush1.msra.mxu0 %v77
    %641 = vmatprep.subr.mxu0 %v74
    %642 = vmatpush1.msra.mxu0 %v73
    %643 = vmatprep.subr.mxu0 %v70
    %644 = vmatpush1.msra.mxu0 %v69
    %645 = vmatprep.subr.mxu0 %v66
    %646 = vmatpush1.msra.mxu0 %v65
    %647 = vmatprep.subr.mxu0 %v62
    %648 = vmatpush1.msra.mxu0 %v61
    %649 = vmatprep.subr.mxu0 %v58
    %650 = vmatpush1.msra.mxu0 %v57
    %651 = vmatprep.subr.mxu0 0.0
    %652 = vmatpush2.msra.mxu0 0.0
    %653 = vmatprep.subr.mxu0 0.0
    %654 = vmatpush2.msra.mxu0 0.0
    %655 = vmatprep.subr.mxu0 0.0
    %656 = vmatpush2.msra.mxu0 0.0
    %657 = vmatprep.subr.mxu0 0.0
    %658 = vmatpush2.msra.mxu0 0.0
    %659 = vmatprep.subr.mxu0 0.0
    %660 = vmatpush2.msra.mxu0 0.0
    %661 = vmatprep.subr.mxu0 0.0
    %662 = vmatpush2.msra.mxu0 0.0
    %663 = vmatprep.subr.mxu0 0.0
    %664 = vmatpush2.msra.mxu0 0.0
    %665 = vmatprep.subr.mxu0 0.0
    %666 = vmatpush2.msra.mxu0 0.0
    %667 = vmatprep.subr.mxu0 %v150
    %668 = vmatpush2.msra.mxu0 %v149
    %669 = vmatprep.subr.mxu0 %v146
    %670 = vmatpush2.msra.mxu0 %v145
    %671 = vmatprep.subr.mxu0 %v142
    %672 = vmatpush2.msra.mxu0 %v141
    %673 = vmatprep.subr.mxu0 %v138
    %674 = vmatpush2.msra.mxu0 %v137
    %675 = vmatprep.subr.mxu0 %v134
    %676 = vmatpush2.msra.mxu0 %v133
    %677 = vmatprep.subr.mxu0 %v130
    %678 = vmatpush2.msra.mxu0 %v129
    %679 = vmatprep.subr.mxu0 %v126
    %680 = vmatpush2.msra.mxu0 %v125
    %681 = vmatprep.subr.mxu0 %v122
    %682 = vmatpush2.msra.mxu0 %v121
    %683 = vmatprep.mubr.f32.mxu0 %v546
    %684 = vmatmul.mubr.f32.gmra.mxu0 %v545
    %v685 = vpop.f32.mrf.mxu0
    %v686 = vadd.f32 %v278, %v685
    %v687 = vpop.f32.mrf.mxu0
    %v688 = vadd.f32 %v282, %v687
    %689 = vdwg.mxu0
    %v690 = vxor.u32 %v615, 2147483648
    %v691 = vxor.u32 %v617, 2147483648
    %v692 = vxor.u32 %v688, 2147483648
    %v693 = vmul.f32 %v690, 1.442695
    %v694 = vpow.pop %v693
    %v695 = vmul.f32 %v691, 1.442695
    %v696 = vpow.pop %v695
    %v697 = vmul.f32 %v692, 1.442695
    %v698 = vpow.pop %v697
    %v699 = vadd.f32 %v694, 1.0
    %v700 = vadd.f32 %v696, 1.0
    %v701 = vadd.f32 %v698, 1.0
    %v702 = vrcp.pop %v699
    %v703 = vmul.f32 1.0, %v702
    %v704 = vrcp.pop %v700
    %v705 = vmul.f32 1.0, %v704
    %v706 = vrcp.pop %v701
    %v707 = vmul.f32 1.0, %v706
    %v708 = vtanh.pop %v686
    %v709 = vmul.f32 %v705, %v452
    %v710 = vmul.f32 %v703, %v708
    %v711 = vadd.f32 %v709, %v710
    %v712 = vtanh.pop %v711
    %v713 = vmul.f32 %v707, %v712
    %714 = vmatprep.subr.mxu0 0.0
    %715 = vmatpush1.msra.mxu0 %v167
    %716 = vmatprep.subr.mxu0 0.0
    %717 = vmatpush1.msra.mxu0 %v166
    %718 = vmatprep.subr.mxu0 0.0
    %719 = vmatpush1.msra.mxu0 %v165
    %720 = vmatprep.subr.mxu0 0.0
    %721 = vmatpush1.msra.mxu0 %v164
    %722 = vmatprep.subr.mxu0 0.0
    %723 = vmatpush1.msra.mxu0 %v163
    %724 = vmatprep.subr.mxu0 0.0
    %725 = vmatpush1.msra.mxu0 %v162
    %726 = vmatprep.subr.mxu0 0.0
    %727 = vmatpush1.msra.mxu0 %v161
    %728 = vmatprep.subr.mxu0 0.0
    %729 = vmatpush1.msra.mxu0 %v160
    %730 = vmatprep.subr.mxu0 0.0
    %731 = vmatpush1.msra.mxu0 %v159
    %732 = vmatprep.subr.mxu0 0.0
    %733 = vmatpush1.msra.mxu0 %v158
    %734 = vmatprep.subr.mxu0 0.0
    %735 = vmatpush1.msra.mxu0 %v157
    %736 = vmatprep.subr.mxu0 0.0
    %737 = vmatpush1.msra.mxu0 %v156
    %738 = vmatprep.subr.mxu0 0.0
    %739 = vmatpush1.msra.mxu0 %v155
    %740 = vmatprep.subr.mxu0 0.0
    %741 = vmatpush1.msra.mxu0 %v154
    %742 = vmatprep.subr.mxu0 0.0
    %743 = vmatpush1.msra.mxu0 %v153
    %744 = vmatprep.subr.mxu0 0.0
    %745 = vmatpush1.msra.mxu0 %v152
    %746 = vmatprep.subr.mxu0 0.0
    %747 = vmatpush2.msra.mxu0 0.0
    %748 = vmatprep.subr.mxu0 0.0
    %749 = vmatpush2.msra.mxu0 0.0
    %750 = vmatprep.subr.mxu0 0.0
    %751 = vmatpush2.msra.mxu0 0.0
    %752 = vmatprep.subr.mxu0 0.0
    %753 = vmatpush2.msra.mxu0 0.0
    %754 = vmatprep.subr.mxu0 0.0
    %755 = vmatpush2.msra.mxu0 0.0
    %756 = vmatprep.subr.mxu0 0.0
    %757 = vmatpush2.msra.mxu0 0.0
    %758 = vmatprep.subr.mxu0 0.0
    %759 = vmatpush2.msra.mxu0 0.0
    %760 = vmatprep.subr.mxu0 0.0
    %761 = vmatpush2.msra.mxu0 0.0
    %762 = vmatprep.subr.mxu0 0.0
    %763 = vmatpush2.msra.mxu0 0.0
    %764 = vmatprep.subr.mxu0 0.0
    %765 = vmatpush2.msra.mxu0 0.0
    %766 = vmatprep.subr.mxu0 0.0
    %767 = vmatpush2.msra.mxu0 0.0
    %768 = vmatprep.subr.mxu0 0.0
    %769 = vmatpush2.msra.mxu0 0.0
    %770 = vmatprep.subr.mxu0 0.0
    %771 = vmatpush2.msra.mxu0 0.0
    %772 = vmatprep.subr.mxu0 0.0
    %773 = vmatpush2.msra.mxu0 0.0
    %774 = vmatprep.subr.mxu0 0.0
    %775 = vmatpush2.msra.mxu0 0.0
    %776 = vmatprep.subr.mxu0 0.0
    %777 = vmatpush2.msra.mxu0 0.0
    %778 = vmatprep.mubr.f32.mxu0 0.0
    %779 = vmatmul.mubr.f32.gmra.mxu0 %v713
    %v780 = vpop.f32.mrf.mxu0
    %v781 = vadd.f32 %v459, %v780
    %v782 = vpop.f32.mrf.mxu0
    %783 = vdwg.mxu0
    %s784 = scalar_lea.vmem %s2, 8
    %v785 = vld [vmem:[%s784] sm:$0xff]
    %787 = vrot.lane.b32.xlu0 %v785, 4
    %v788 = vpop.permute.xlu0 %787
    %v790 = vadd.f32 %v781, %v788
    %792 = vrot.lane.b32.xlu0 %v790, 124
    %v793 = vpop.permute.xlu0 %792
    %796 = vrot.lane.b32.xlu0 %v713, 64
    %v797 = vpop.permute.xlu0 %796
    %v799 = vsel %vm264, %v793, %v797
    %v800 = vsel %vm264, %v797, 0
    %802 = vmatprep.subr.mxu0 %v116
    %803 = vmatpush1.msra.mxu0 %v115
    %804 = vmatprep.subr.mxu0 %v112
    %805 = vmatpush1.msra.mxu0 %v111
    %806 = vmatprep.subr.mxu0 %v108
    %807 = vmatpush1.msra.mxu0 %v107
    %808 = vmatprep.subr.mxu0 %v104
    %809 = vmatpush1.msra.mxu0 %v103
    %810 = vmatprep.subr.mxu0 %v100
    %811 = vmatpush1.msra.mxu0 %v99
    %812 = vmatprep.subr.mxu0 %v96
    %813 = vmatpush1.msra.mxu0 %v95
    %814 = vmatprep.subr.mxu0 %v92
    %815 = vmatpush1.msra.mxu0 %v91
    %816 = vmatprep.subr.mxu0 %v88
    %817 = vmatpush1.msra.mxu0 %v87
    %818 = vmatprep.subr.mxu0 %v84
    %819 = vmatpush1.msra.mxu0 %v83
    %820 = vmatprep.subr.mxu0 %v80
    %821 = vmatpush1.msra.mxu0 %v79
    %822 = vmatprep.subr.mxu0 %v76
    %823 = vmatpush1.msra.mxu0 %v75
    %824 = vmatprep.subr.mxu0 %v72
    %825 = vmatpush1.msra.mxu0 %v71
    %826 = vmatprep.subr.mxu0 %v68
    %827 = vmatpush1.msra.mxu0 %v67
    %828 = vmatprep.subr.mxu0 %v64
    %829 = vmatpush1.msra.mxu0 %v63
    %830 = vmatprep.subr.mxu0 %v60
    %831 = vmatpush1.msra.mxu0 %v59
    %832 = vmatprep.subr.mxu0 %v56
    %833 = vmatpush1.msra.mxu0 %v55
    %834 = vmatprep.subr.mxu0 0.0
    %835 = vmatpush2.msra.mxu0 0.0
    %836 = vmatprep.subr.mxu0 0.0
    %837 = vmatpush2.msra.mxu0 0.0
    %838 = vmatprep.subr.mxu0 0.0
    %839 = vmatpush2.msra.mxu0 0.0
    %840 = vmatprep.subr.mxu0 0.0
    %841 = vmatpush2.msra.mxu0 0.0
    %842 = vmatprep.subr.mxu0 0.0
    %843 = vmatpush2.msra.mxu0 0.0
    %844 = vmatprep.subr.mxu0 0.0
    %845 = vmatpush2.msra.mxu0 0.0
    %846 = vmatprep.subr.mxu0 0.0
    %847 = vmatpush2.msra.mxu0 0.0
    %848 = vmatprep.subr.mxu0 0.0
    %849 = vmatpush2.msra.mxu0 0.0
    %850 = vmatprep.subr.mxu0 %v148
    %851 = vmatpush2.msra.mxu0 %v147
    %852 = vmatprep.subr.mxu0 %v144
    %853 = vmatpush2.msra.mxu0 %v143
    %854 = vmatprep.subr.mxu0 %v140
    %855 = vmatpush2.msra.mxu0 %v139
    %856 = vmatprep.subr.mxu0 %v136
    %857 = vmatpush2.msra.mxu0 %v135
    %858 = vmatprep.subr.mxu0 %v132
    %859 = vmatpush2.msra.mxu0 %v131
    %860 = vmatprep.subr.mxu0 %v128
    %861 = vmatpush2.msra.mxu0 %v127
    %862 = vmatprep.subr.mxu0 %v124
    %863 = vmatpush2.msra.mxu0 %v123
    %864 = vmatprep.subr.mxu0 %v120
    %865 = vmatpush2.msra.mxu0 %v119
    %866 = vmatprep.mubr.f32.mxu0 %v800
    %867 = vmatmul.mubr.f32.gmra.mxu0 %v799
    %v868 = vpop.f32.mrf.mxu0
    %v869 = vadd.f32 %v270, %v868
    %v870 = vpop.f32.mrf.mxu0
    %v871 = vadd.f32 %v274, %v870
    %872 = vdwg.mxu0
    %873 = vmatprep.subr.mxu0 %v118
    %874 = vmatpush1.msra.mxu0 %v117
    %875 = vmatprep.subr.mxu0 %v114
    %876 = vmatpush1.msra.mxu0 %v113
    %877 = vmatprep.subr.mxu0 %v110
    %878 = vmatpush1.msra.mxu0 %v109
    %879 = vmatprep.subr.mxu0 %v106
    %880 = vmatpush1.msra.mxu0 %v105
    %881 = vmatprep.subr.mxu0 %v102
    %882 = vmatpush1.msra.mxu0 %v101
    %883 = vmatprep.subr.mxu0 %v98
    %884 = vmatpush1.msra.mxu0 %v97
    %885 = vmatprep.subr.mxu0 %v94
    %886 = vmatpush1.msra.mxu0 %v93
    %887 = vmatprep.subr.mxu0 %v90
    %888 = vmatpush1.msra.mxu0 %v89
    %889 = vmatprep.subr.mxu0 %v86
    %890 = vmatpush1.msra.mxu0 %v85
    %891 = vmatprep.subr.mxu0 %v82
    %892 = vmatpush1.msra.mxu0 %v81
    %893 = vmatprep.subr.mxu0 %v78
    %894 = vmatpush1.msra.mxu0 %v77
    %895 = vmatprep.subr.mxu0 %v74
    %896 = vmatpush1.msra.mxu0 %v73
    %897 = vmatprep.subr.mxu0 %v70
    %898 = vmatpush1.msra.mxu0 %v69
    %899 = vmatprep.subr.mxu0 %v66
    %900 = vmatpush1.msra.mxu0 %v65
    %901 = vmatprep.subr.mxu0 %v62
    %902 = vmatpush1.msra.mxu0 %v61
    %903 = vmatprep.subr.mxu0 %v58
    %904 = vmatpush1.msra.mxu0 %v57
    %905 = vmatprep.subr.mxu0 0.0
    %906 = vmatpush2.msra.mxu0 0.0
    %907 = vmatprep.subr.mxu0 0.0
    %908 = vmatpush2.msra.mxu0 0.0
    %909 = vmatprep.subr.mxu0 0.0
    %910 = vmatpush2.msra.mxu0 0.0
    %911 = vmatprep.subr.mxu0 0.0
    %912 = vmatpush2.msra.mxu0 0.0
    %913 = vmatprep.subr.mxu0 0.0
    %914 = vmatpush2.msra.mxu0 0.0
    %915 = vmatprep.subr.mxu0 0.0
    %916 = vmatpush2.msra.mxu0 0.0
    %917 = vmatprep.subr.mxu0 0.0
    %918 = vmatpush2.msra.mxu0 0.0
    %919 = vmatprep.subr.mxu0 0.0
    %920 = vmatpush2.msra.mxu0 0.0
    %921 = vmatprep.subr.mxu0 %v150
    %922 = vmatpush2.msra.mxu0 %v149
    %923 = vmatprep.subr.mxu0 %v146
    %924 = vmatpush2.msra.mxu0 %v145
    %925 = vmatprep.subr.mxu0 %v142
    %926 = vmatpush2.msra.mxu0 %v141
    %927 = vmatprep.subr.mxu0 %v138
    %928 = vmatpush2.msra.mxu0 %v137
    %929 = vmatprep.subr.mxu0 %v134
    %930 = vmatpush2.msra.mxu0 %v133
    %931 = vmatprep.subr.mxu0 %v130
    %932 = vmatpush2.msra.mxu0 %v129
    %933 = vmatprep.subr.mxu0 %v126
    %934 = vmatpush2.msra.mxu0 %v125
    %935 = vmatprep.subr.mxu0 %v122
    %936 = vmatpush2.msra.mxu0 %v121
    %937 = vmatprep.mubr.f32.mxu0 %v800
    %938 = vmatmul.mubr.f32.gmra.mxu0 %v799
    %v939 = vpop.f32.mrf.mxu0
    %v940 = vadd.f32 %v278, %v939
    %v941 = vpop.f32.mrf.mxu0
    %v942 = vadd.f32 %v282, %v941
    %943 = vdwg.mxu0
    %v944 = vxor.u32 %v869, 2147483648
    %v945 = vxor.u32 %v871, 2147483648
    %v946 = vxor.u32 %v942, 2147483648
    %v947 = vmul.f32 %v944, 1.442695
    %v948 = vpow.pop %v947
    %v949 = vmul.f32 %v945, 1.442695
    %v950 = vpow.pop %v949
    %v951 = vmul.f32 %v946, 1.442695
    %v952 = vpow.pop %v951
    %v953 = vadd.f32 %v948, 1.0
    %v954 = vadd.f32 %v950, 1.0
    %v955 = vadd.f32 %v952, 1.0
    %v956 = vrcp.pop %v953
    %v957 = vmul.f32 1.0, %v956
    %v958 = vrcp.pop %v954
    %v959 = vmul.f32 1.0, %v958
    %v960 = vrcp.pop %v955
    %v961 = vmul.f32 1.0, %v960
    %v962 = vtanh.pop %v940
    %v963 = vmul.f32 %v959, %v711
    %v964 = vmul.f32 %v957, %v962
    %v965 = vadd.f32 %v963, %v964
    %v966 = vtanh.pop %v965
    %v967 = vmul.f32 %v961, %v966
    %968 = vmatprep.subr.mxu0 0.0
    %969 = vmatpush1.msra.mxu0 %v167
    %970 = vmatprep.subr.mxu0 0.0
    %971 = vmatpush1.msra.mxu0 %v166
    %972 = vmatprep.subr.mxu0 0.0
    %973 = vmatpush1.msra.mxu0 %v165
    %974 = vmatprep.subr.mxu0 0.0
    %975 = vmatpush1.msra.mxu0 %v164
    %976 = vmatprep.subr.mxu0 0.0
    %977 = vmatpush1.msra.mxu0 %v163
    %978 = vmatprep.subr.mxu0 0.0
    %979 = vmatpush1.msra.mxu0 %v162
    %980 = vmatprep.subr.mxu0 0.0
    %981 = vmatpush1.msra.mxu0 %v161
    %982 = vmatprep.subr.mxu0 0.0
    %983 = vmatpush1.msra.mxu0 %v160
    %984 = vmatprep.subr.mxu0 0.0
    %985 = vmatpush1.msra.mxu0 %v159
    %986 = vmatprep.subr.mxu0 0.0
    %987 = vmatpush1.msra.mxu0 %v158
    %988 = vmatprep.subr.mxu0 0.0
    %989 = vmatpush1.msra.mxu0 %v157
    %990 = vmatprep.subr.mxu0 0.0
    %991 = vmatpush1.msra.mxu0 %v156
    %992 = vmatprep.subr.mxu0 0.0
    %993 = vmatpush1.msra.mxu0 %v155
    %994 = vmatprep.subr.mxu0 0.0
    %995 = vmatpush1.msra.mxu0 %v154
    %996 = vmatprep.subr.mxu0 0.0
    %997 = vmatpush1.msra.mxu0 %v153
    %998 = vmatprep.subr.mxu0 0.0
    %999 = vmatpush1.msra.mxu0 %v152
    %1000 = vmatprep.subr.mxu0 0.0
    %1001 = vmatpush2.msra.mxu0 0.0
    %1002 = vmatprep.subr.mxu0 0.0
    %1003 = vmatpush2.msra.mxu0 0.0
    %1004 = vmatprep.subr.mxu0 0.0
    %1005 = vmatpush2.msra.mxu0 0.0
    %1006 = vmatprep.subr.mxu0 0.0
    %1007 = vmatpush2.msra.mxu0 0.0
    %1008 = vmatprep.subr.mxu0 0.0
    %1009 = vmatpush2.msra.mxu0 0.0
    %1010 = vmatprep.subr.mxu0 0.0
    %1011 = vmatpush2.msra.mxu0 0.0
    %1012 = vmatprep.subr.mxu0 0.0
    %1013 = vmatpush2.msra.mxu0 0.0
    %1014 = vmatprep.subr.mxu0 0.0
    %1015 = vmatpush2.msra.mxu0 0.0
    %1016 = vmatprep.subr.mxu0 0.0
    %1017 = vmatpush2.msra.mxu0 0.0
    %1018 = vmatprep.subr.mxu0 0.0
    %1019 = vmatpush2.msra.mxu0 0.0
    %1020 = vmatprep.subr.mxu0 0.0
    %1021 = vmatpush2.msra.mxu0 0.0
    %1022 = vmatprep.subr.mxu0 0.0
    %1023 = vmatpush2.msra.mxu0 0.0
    %1024 = vmatprep.subr.mxu0 0.0
    %1025 = vmatpush2.msra.mxu0 0.0
    %1026 = vmatprep.subr.mxu0 0.0
    %1027 = vmatpush2.msra.mxu0 0.0
    %1028 = vmatprep.subr.mxu0 0.0
    %1029 = vmatpush2.msra.mxu0 0.0
    %1030 = vmatprep.subr.mxu0 0.0
    %1031 = vmatpush2.msra.mxu0 0.0
    %1032 = vmatprep.mubr.f32.mxu0 0.0
    %1033 = vmatmul.mubr.f32.gmra.mxu0 %v967
    %v1034 = vpop.f32.mrf.mxu0
    %v1035 = vadd.f32 %v459, %v1034
    %v1036 = vpop.f32.mrf.mxu0
    %1037 = vdwg.mxu0
    %s1038 = scalar_lea.vmem %s2, 16
    %v1039 = vld [vmem:[%s1038] sm:$0xff]
    %1041 = vrot.lane.b32.xlu0 %v1039, 4
    %v1042 = vpop.permute.xlu0 %1041
    %v1044 = vadd.f32 %v1035, %v1042
    %1046 = vrot.lane.b32.xlu0 %v1044, 124
    %v1047 = vpop.permute.xlu0 %1046
    %1050 = vrot.lane.b32.xlu0 %v967, 64
    %v1051 = vpop.permute.xlu0 %1050
    %v1053 = vsel %vm264, %v1047, %v1051
    %v1054 = vsel %vm264, %v1051, 0
    %1056 = vmatprep.subr.mxu0 %v116
    %1057 = vmatpush1.msra.mxu0 %v115
    %1058 = vmatprep.subr.mxu0 %v112
    %1059 = vmatpush1.msra.mxu0 %v111
    %1060 = vmatprep.subr.mxu0 %v108
    %1061 = vmatpush1.msra.mxu0 %v107
    %1062 = vmatprep.subr.mxu0 %v104
    %1063 = vmatpush1.msra.mxu0 %v103
    %1064 = vmatprep.subr.mxu0 %v100
    %1065 = vmatpush1.msra.mxu0 %v99
    %1066 = vmatprep.subr.mxu0 %v96
    %1067 = vmatpush1.msra.mxu0 %v95
    %1068 = vmatprep.subr.mxu0 %v92
    %1069 = vmatpush1.msra.mxu0 %v91
    %1070 = vmatprep.subr.mxu0 %v88
    %1071 = vmatpush1.msra.mxu0 %v87
    %1072 = vmatprep.subr.mxu0 %v84
    %1073 = vmatpush1.msra.mxu0 %v83
    %1074 = vmatprep.subr.mxu0 %v80
    %1075 = vmatpush1.msra.mxu0 %v79
    %1076 = vmatprep.subr.mxu0 %v76
    %1077 = vmatpush1.msra.mxu0 %v75
    %1078 = vmatprep.subr.mxu0 %v72
    %1079 = vmatpush1.msra.mxu0 %v71
    %1080 = vmatprep.subr.mxu0 %v68
    %1081 = vmatpush1.msra.mxu0 %v67
    %1082 = vmatprep.subr.mxu0 %v64
    %1083 = vmatpush1.msra.mxu0 %v63
    %1084 = vmatprep.subr.mxu0 %v60
    %1085 = vmatpush1.msra.mxu0 %v59
    %1086 = vmatprep.subr.mxu0 %v56
    %1087 = vmatpush1.msra.mxu0 %v55
    %1088 = vmatprep.subr.mxu0 0.0
    %1089 = vmatpush2.msra.mxu0 0.0
    %1090 = vmatprep.subr.mxu0 0.0
    %1091 = vmatpush2.msra.mxu0 0.0
    %1092 = vmatprep.subr.mxu0 0.0
    %1093 = vmatpush2.msra.mxu0 0.0
    %1094 = vmatprep.subr.mxu0 0.0
    %1095 = vmatpush2.msra.mxu0 0.0
    %1096 = vmatprep.subr.mxu0 0.0
    %1097 = vmatpush2.msra.mxu0 0.0
    %1098 = vmatprep.subr.mxu0 0.0
    %1099 = vmatpush2.msra.mxu0 0.0
    %1100 = vmatprep.subr.mxu0 0.0
    %1101 = vmatpush2.msra.mxu0 0.0
    %1102 = vmatprep.subr.mxu0 0.0
    %1103 = vmatpush2.msra.mxu0 0.0
    %1104 = vmatprep.subr.mxu0 %v148
    %1105 = vmatpush2.msra.mxu0 %v147
    %1106 = vmatprep.subr.mxu0 %v144
    %1107 = vmatpush2.msra.mxu0 %v143
    %1108 = vmatprep.subr.mxu0 %v140
    %1109 = vmatpush2.msra.mxu0 %v139
    %1110 = vmatprep.subr.mxu0 %v136
    %1111 = vmatpush2.msra.mxu0 %v135
    %1112 = vmatprep.subr.mxu0 %v132
    %1113 = vmatpush2.msra.mxu0 %v131
    %1114 = vmatprep.subr.mxu0 %v128
    %1115 = vmatpush2.msra.mxu0 %v127
    %1116 = vmatprep.subr.mxu0 %v124
    %1117 = vmatpush2.msra.mxu0 %v123
    %1118 = vmatprep.subr.mxu0 %v120
    %1119 = vmatpush2.msra.mxu0 %v119
    %1120 = vmatprep.mubr.f32.mxu0 %v1054
    %1121 = vmatmul.mubr.f32.gmra.mxu0 %v1053
    %v1122 = vpop.f32.mrf.mxu0
    %v1123 = vadd.f32 %v270, %v1122
    %v1124 = vpop.f32.mrf.mxu0
    %v1125 = vadd.f32 %v274, %v1124
    %1126 = vdwg.mxu0
    %1127 = vmatprep.subr.mxu0 %v118
    %1128 = vmatpush1.msra.mxu0 %v117
    %1129 = vmatprep.subr.mxu0 %v114
    %1130 = vmatpush1.msra.mxu0 %v113
    %1131 = vmatprep.subr.mxu0 %v110
    %1132 = vmatpush1.msra.mxu0 %v109
    %1133 = vmatprep.subr.mxu0 %v106
    %1134 = vmatpush1.msra.mxu0 %v105
    %1135 = vmatprep.subr.mxu0 %v102
    %1136 = vmatpush1.msra.mxu0 %v101
    %1137 = vmatprep.subr.mxu0 %v98
    %1138 = vmatpush1.msra.mxu0 %v97
    %1139 = vmatprep.subr.mxu0 %v94
    %1140 = vmatpush1.msra.mxu0 %v93
    %1141 = vmatprep.subr.mxu0 %v90
    %1142 = vmatpush1.msra.mxu0 %v89
    %1143 = vmatprep.subr.mxu0 %v86
    %1144 = vmatpush1.msra.mxu0 %v85
    %1145 = vmatprep.subr.mxu0 %v82
    %1146 = vmatpush1.msra.mxu0 %v81
    %1147 = vmatprep.subr.mxu0 %v78
    %1148 = vmatpush1.msra.mxu0 %v77
    %1149 = vmatprep.subr.mxu0 %v74
    %1150 = vmatpush1.msra.mxu0 %v73
    %1151 = vmatprep.subr.mxu0 %v70
    %1152 = vmatpush1.msra.mxu0 %v69
    %1153 = vmatprep.subr.mxu0 %v66
    %1154 = vmatpush1.msra.mxu0 %v65
    %1155 = vmatprep.subr.mxu0 %v62
    %1156 = vmatpush1.msra.mxu0 %v61
    %1157 = vmatprep.subr.mxu0 %v58
    %1158 = vmatpush1.msra.mxu0 %v57
    %1159 = vmatprep.subr.mxu0 0.0
    %1160 = vmatpush2.msra.mxu0 0.0
    %1161 = vmatprep.subr.mxu0 0.0
    %1162 = vmatpush2.msra.mxu0 0.0
    %1163 = vmatprep.subr.mxu0 0.0
    %1164 = vmatpush2.msra.mxu0 0.0
    %1165 = vmatprep.subr.mxu0 0.0
    %1166 = vmatpush2.msra.mxu0 0.0
    %1167 = vmatprep.subr.mxu0 0.0
    %1168 = vmatpush2.msra.mxu0 0.0
    %1169 = vmatprep.subr.mxu0 0.0
    %1170 = vmatpush2.msra.mxu0 0.0
    %1171 = vmatprep.subr.mxu0 0.0
    %1172 = vmatpush2.msra.mxu0 0.0
    %1173 = vmatprep.subr.mxu0 0.0
    %1174 = vmatpush2.msra.mxu0 0.0
    %1175 = vmatprep.subr.mxu0 %v150
    %1176 = vmatpush2.msra.mxu0 %v149
    %1177 = vmatprep.subr.mxu0 %v146
    %1178 = vmatpush2.msra.mxu0 %v145
    %1179 = vmatprep.subr.mxu0 %v142
    %1180 = vmatpush2.msra.mxu0 %v141
    %1181 = vmatprep.subr.mxu0 %v138
    %1182 = vmatpush2.msra.mxu0 %v137
    %1183 = vmatprep.subr.mxu0 %v134
    %1184 = vmatpush2.msra.mxu0 %v133
    %1185 = vmatprep.subr.mxu0 %v130
    %1186 = vmatpush2.msra.mxu0 %v129
    %1187 = vmatprep.subr.mxu0 %v126
    %1188 = vmatpush2.msra.mxu0 %v125
    %1189 = vmatprep.subr.mxu0 %v122
    %1190 = vmatpush2.msra.mxu0 %v121
    %1191 = vmatprep.mubr.f32.mxu0 %v1054
    %1192 = vmatmul.mubr.f32.gmra.mxu0 %v1053
    %v1193 = vpop.f32.mrf.mxu0
    %v1194 = vadd.f32 %v278, %v1193
    %v1195 = vpop.f32.mrf.mxu0
    %v1196 = vadd.f32 %v282, %v1195
    %1197 = vdwg.mxu0
    %v1198 = vxor.u32 %v1123, 2147483648
    %v1199 = vxor.u32 %v1125, 2147483648
    %v1200 = vxor.u32 %v1196, 2147483648
    %v1201 = vmul.f32 %v1198, 1.442695
    %v1202 = vpow.pop %v1201
    %v1203 = vmul.f32 %v1199, 1.442695
    %v1204 = vpow.pop %v1203
    %v1205 = vmul.f32 %v1200, 1.442695
    %v1206 = vpow.pop %v1205
    %v1207 = vadd.f32 %v1202, 1.0
    %v1208 = vadd.f32 %v1204, 1.0
    %v1209 = vadd.f32 %v1206, 1.0
    %v1210 = vrcp.pop %v1207
    %v1211 = vmul.f32 1.0, %v1210
    %v1212 = vrcp.pop %v1208
    %v1213 = vmul.f32 1.0, %v1212
    %v1214 = vrcp.pop %v1209
    %v1215 = vmul.f32 1.0, %v1214
    %v1216 = vtanh.pop %v1194
    %v1217 = vmul.f32 %v1213, %v965
    %v1218 = vmul.f32 %v1211, %v1216
    %v1219 = vadd.f32 %v1217, %v1218
    %v1220 = vtanh.pop %v1219
    %v1221 = vmul.f32 %v1215, %v1220
    %1222 = vmatprep.subr.mxu0 0.0
    %1223 = vmatpush1.msra.mxu0 %v167
    %1224 = vmatprep.subr.mxu0 0.0
    %1225 = vmatpush1.msra.mxu0 %v166
    %1226 = vmatprep.subr.mxu0 0.0
    %1227 = vmatpush1.msra.mxu0 %v165
    %1228 = vmatprep.subr.mxu0 0.0
    %1229 = vmatpush1.msra.mxu0 %v164
    %1230 = vmatprep.subr.mxu0 0.0
    %1231 = vmatpush1.msra.mxu0 %v163
    %1232 = vmatprep.subr.mxu0 0.0
    %1233 = vmatpush1.msra.mxu0 %v162
    %1234 = vmatprep.subr.mxu0 0.0
    %1235 = vmatpush1.msra.mxu0 %v161
    %1236 = vmatprep.subr.mxu0 0.0
    %1237 = vmatpush1.msra.mxu0 %v160
    %1238 = vmatprep.subr.mxu0 0.0
    %1239 = vmatpush1.msra.mxu0 %v159
    %1240 = vmatprep.subr.mxu0 0.0
    %1241 = vmatpush1.msra.mxu0 %v158
    %1242 = vmatprep.subr.mxu0 0.0
    %1243 = vmatpush1.msra.mxu0 %v157
    %1244 = vmatprep.subr.mxu0 0.0
    %1245 = vmatpush1.msra.mxu0 %v156
    %1246 = vmatprep.subr.mxu0 0.0
    %1247 = vmatpush1.msra.mxu0 %v155
    %1248 = vmatprep.subr.mxu0 0.0
    %1249 = vmatpush1.msra.mxu0 %v154
    %1250 = vmatprep.subr.mxu0 0.0
    %1251 = vmatpush1.msra.mxu0 %v153
    %1252 = vmatprep.subr.mxu0 0.0
    %1253 = vmatpush1.msra.mxu0 %v152
    %1254 = vmatprep.subr.mxu0 0.0
    %1255 = vmatpush2.msra.mxu0 0.0
    %1256 = vmatprep.subr.mxu0 0.0
    %1257 = vmatpush2.msra.mxu0 0.0
    %1258 = vmatprep.subr.mxu0 0.0
    %1259 = vmatpush2.msra.mxu0 0.0
    %1260 = vmatprep.subr.mxu0 0.0
    %1261 = vmatpush2.msra.mxu0 0.0
    %1262 = vmatprep.subr.mxu0 0.0
    %1263 = vmatpush2.msra.mxu0 0.0
    %1264 = vmatprep.subr.mxu0 0.0
    %1265 = vmatpush2.msra.mxu0 0.0
    %1266 = vmatprep.subr.mxu0 0.0
    %1267 = vmatpush2.msra.mxu0 0.0
    %1268 = vmatprep.subr.mxu0 0.0
    %1269 = vmatpush2.msra.mxu0 0.0
    %1270 = vmatprep.subr.mxu0 0.0
    %1271 = vmatpush2.msra.mxu0 0.0
    %1272 = vmatprep.subr.mxu0 0.0
    %1273 = vmatpush2.msra.mxu0 0.0
    %1274 = vmatprep.subr.mxu0 0.0
    %1275 = vmatpush2.msra.mxu0 0.0
    %1276 = vmatprep.subr.mxu0 0.0
    %1277 = vmatpush2.msra.mxu0 0.0
    %1278 = vmatprep.subr.mxu0 0.0
    %1279 = vmatpush2.msra.mxu0 0.0
    %1280 = vmatprep.subr.mxu0 0.0
    %1281 = vmatpush2.msra.mxu0 0.0
    %1282 = vmatprep.subr.mxu0 0.0
    %1283 = vmatpush2.msra.mxu0 0.0
    %1284 = vmatprep.subr.mxu0 0.0
    %1285 = vmatpush2.msra.mxu0 0.0
    %1286 = vmatprep.mubr.f32.mxu0 0.0
    %1287 = vmatmul.mubr.f32.gmra.mxu0 %v1221
    %v1288 = vpop.f32.mrf.mxu0
    %v1289 = vadd.f32 %v459, %v1288
    %v1290 = vpop.f32.mrf.mxu0
    %1291 = vdwg.mxu0
    %s1292 = scalar_lea.vmem %s2, 24
    %v1293 = vld [vmem:[%s1292] sm:$0xff]
    %1295 = vrot.lane.b32.xlu0 %v1293, 4
    %v1296 = vpop.permute.xlu0 %1295
    %v1298 = vadd.f32 %v1289, %v1296
    %1300 = vrot.lane.b32.xlu0 %v1298, 124
    %v1301 = vpop.permute.xlu0 %1300
    %1304 = vrot.lane.b32.xlu0 %v1221, 64
    %v1305 = vpop.permute.xlu0 %1304
    %v1307 = vsel %vm264, %v1301, %v1305
    %v1308 = vsel %vm264, %v1305, 0
    %1310 = vmatprep.subr.mxu0 %v116
    %1311 = vmatpush1.msra.mxu0 %v115
    %1312 = vmatprep.subr.mxu0 %v112
    %1313 = vmatpush1.msra.mxu0 %v111
    %1314 = vmatprep.subr.mxu0 %v108
    %1315 = vmatpush1.msra.mxu0 %v107
    %1316 = vmatprep.subr.mxu0 %v104
    %1317 = vmatpush1.msra.mxu0 %v103
    %1318 = vmatprep.subr.mxu0 %v100
    %1319 = vmatpush1.msra.mxu0 %v99
    %1320 = vmatprep.subr.mxu0 %v96
    %1321 = vmatpush1.msra.mxu0 %v95
    %1322 = vmatprep.subr.mxu0 %v92
    %1323 = vmatpush1.msra.mxu0 %v91
    %1324 = vmatprep.subr.mxu0 %v88
    %1325 = vmatpush1.msra.mxu0 %v87
    %1326 = vmatprep.subr.mxu0 %v84
    %1327 = vmatpush1.msra.mxu0 %v83
    %1328 = vmatprep.subr.mxu0 %v80
    %1329 = vmatpush1.msra.mxu0 %v79
    %1330 = vmatprep.subr.mxu0 %v76
    %1331 = vmatpush1.msra.mxu0 %v75
    %1332 = vmatprep.subr.mxu0 %v72
    %1333 = vmatpush1.msra.mxu0 %v71
    %1334 = vmatprep.subr.mxu0 %v68
    %1335 = vmatpush1.msra.mxu0 %v67
    %1336 = vmatprep.subr.mxu0 %v64
    %1337 = vmatpush1.msra.mxu0 %v63
    %1338 = vmatprep.subr.mxu0 %v60
    %1339 = vmatpush1.msra.mxu0 %v59
    %1340 = vmatprep.subr.mxu0 %v56
    %1341 = vmatpush1.msra.mxu0 %v55
    %1342 = vmatprep.subr.mxu0 0.0
    %1343 = vmatpush2.msra.mxu0 0.0
    %1344 = vmatprep.subr.mxu0 0.0
    %1345 = vmatpush2.msra.mxu0 0.0
    %1346 = vmatprep.subr.mxu0 0.0
    %1347 = vmatpush2.msra.mxu0 0.0
    %1348 = vmatprep.subr.mxu0 0.0
    %1349 = vmatpush2.msra.mxu0 0.0
    %1350 = vmatprep.subr.mxu0 0.0
    %1351 = vmatpush2.msra.mxu0 0.0
    %1352 = vmatprep.subr.mxu0 0.0
    %1353 = vmatpush2.msra.mxu0 0.0
    %1354 = vmatprep.subr.mxu0 0.0
    %1355 = vmatpush2.msra.mxu0 0.0
    %1356 = vmatprep.subr.mxu0 0.0
    %1357 = vmatpush2.msra.mxu0 0.0
    %1358 = vmatprep.subr.mxu0 %v148
    %1359 = vmatpush2.msra.mxu0 %v147
    %1360 = vmatprep.subr.mxu0 %v144
    %1361 = vmatpush2.msra.mxu0 %v143
    %1362 = vmatprep.subr.mxu0 %v140
    %1363 = vmatpush2.msra.mxu0 %v139
    %1364 = vmatprep.subr.mxu0 %v136
    %1365 = vmatpush2.msra.mxu0 %v135
    %1366 = vmatprep.subr.mxu0 %v132
    %1367 = vmatpush2.msra.mxu0 %v131
    %1368 = vmatprep.subr.mxu0 %v128
    %1369 = vmatpush2.msra.mxu0 %v127
    %1370 = vmatprep.subr.mxu0 %v124
    %1371 = vmatpush2.msra.mxu0 %v123
    %1372 = vmatprep.subr.mxu0 %v120
    %1373 = vmatpush2.msra.mxu0 %v119
    %1374 = vmatprep.mubr.f32.mxu0 %v1308
    %1375 = vmatmul.mubr.f32.gmra.mxu0 %v1307
    %v1376 = vpop.f32.mrf.mxu0
    %v1377 = vadd.f32 %v270, %v1376
    %v1378 = vpop.f32.mrf.mxu0
    %v1379 = vadd.f32 %v274, %v1378
    %1380 = vdwg.mxu0
    %1381 = vmatprep.subr.mxu0 %v118
    %1382 = vmatpush1.msra.mxu0 %v117
    %1383 = vmatprep.subr.mxu0 %v114
    %1384 = vmatpush1.msra.mxu0 %v113
    %1385 = vmatprep.subr.mxu0 %v110
    %1386 = vmatpush1.msra.mxu0 %v109
    %1387 = vmatprep.subr.mxu0 %v106
    %1388 = vmatpush1.msra.mxu0 %v105
    %1389 = vmatprep.subr.mxu0 %v102
    %1390 = vmatpush1.msra.mxu0 %v101
    %1391 = vmatprep.subr.mxu0 %v98
    %1392 = vmatpush1.msra.mxu0 %v97
    %1393 = vmatprep.subr.mxu0 %v94
    %1394 = vmatpush1.msra.mxu0 %v93
    %1395 = vmatprep.subr.mxu0 %v90
    %1396 = vmatpush1.msra.mxu0 %v89
    %1397 = vmatprep.subr.mxu0 %v86
    %1398 = vmatpush1.msra.mxu0 %v85
    %1399 = vmatprep.subr.mxu0 %v82
    %1400 = vmatpush1.msra.mxu0 %v81
    %1401 = vmatprep.subr.mxu0 %v78
    %1402 = vmatpush1.msra.mxu0 %v77
    %1403 = vmatprep.subr.mxu0 %v74
    %1404 = vmatpush1.msra.mxu0 %v73
    %1405 = vmatprep.subr.mxu0 %v70
    %1406 = vmatpush1.msra.mxu0 %v69
    %1407 = vmatprep.subr.mxu0 %v66
    %1408 = vmatpush1.msra.mxu0 %v65
    %1409 = vmatprep.subr.mxu0 %v62
    %1410 = vmatpush1.msra.mxu0 %v61
    %1411 = vmatprep.subr.mxu0 %v58
    %1412 = vmatpush1.msra.mxu0 %v57
    %1413 = vmatprep.subr.mxu0 0.0
    %1414 = vmatpush2.msra.mxu0 0.0
    %1415 = vmatprep.subr.mxu0 0.0
    %1416 = vmatpush2.msra.mxu0 0.0
    %1417 = vmatprep.subr.mxu0 0.0
    %1418 = vmatpush2.msra.mxu0 0.0
    %1419 = vmatprep.subr.mxu0 0.0
    %1420 = vmatpush2.msra.mxu0 0.0
    %1421 = vmatprep.subr.mxu0 0.0
    %1422 = vmatpush2.msra.mxu0 0.0
    %1423 = vmatprep.subr.mxu0 0.0
    %1424 = vmatpush2.msra.mxu0 0.0
    %1425 = vmatprep.subr.mxu0 0.0
    %1426 = vmatpush2.msra.mxu0 0.0
    %1427 = vmatprep.subr.mxu0 0.0
    %1428 = vmatpush2.msra.mxu0 0.0
    %1429 = vmatprep.subr.mxu0 %v150
    %1430 = vmatpush2.msra.mxu0 %v149
    %1431 = vmatprep.subr.mxu0 %v146
    %1432 = vmatpush2.msra.mxu0 %v145
    %1433 = vmatprep.subr.mxu0 %v142
    %1434 = vmatpush2.msra.mxu0 %v141
    %1435 = vmatprep.subr.mxu0 %v138
    %1436 = vmatpush2.msra.mxu0 %v137
    %1437 = vmatprep.subr.mxu0 %v134
    %1438 = vmatpush2.msra.mxu0 %v133
    %1439 = vmatprep.subr.mxu0 %v130
    %1440 = vmatpush2.msra.mxu0 %v129
    %1441 = vmatprep.subr.mxu0 %v126
    %1442 = vmatpush2.msra.mxu0 %v125
    %1443 = vmatprep.subr.mxu0 %v122
    %1444 = vmatpush2.msra.mxu0 %v121
    %1445 = vmatprep.mubr.f32.mxu0 %v1308
    %1446 = vmatmul.mubr.f32.gmra.mxu0 %v1307
    %v1447 = vpop.f32.mrf.mxu0
    %v1448 = vadd.f32 %v278, %v1447
    %v1449 = vpop.f32.mrf.mxu0
    %v1450 = vadd.f32 %v282, %v1449
    %1451 = vdwg.mxu0
    %v1452 = vxor.u32 %v1377, 2147483648
    %v1453 = vxor.u32 %v1379, 2147483648
    %v1454 = vxor.u32 %v1450, 2147483648
    %v1455 = vmul.f32 %v1452, 1.442695
    %v1456 = vpow.pop %v1455
    %v1457 = vmul.f32 %v1453, 1.442695
    %v1458 = vpow.pop %v1457
    %v1459 = vmul.f32 %v1454, 1.442695
    %v1460 = vpow.pop %v1459
    %v1461 = vadd.f32 %v1456, 1.0
    %v1462 = vadd.f32 %v1458, 1.0
    %v1463 = vadd.f32 %v1460, 1.0
    %v1464 = vrcp.pop %v1461
    %v1465 = vmul.f32 1.0, %v1464
    %v1466 = vrcp.pop %v1462
    %v1467 = vmul.f32 1.0, %v1466
    %v1468 = vrcp.pop %v1463
    %v1469 = vmul.f32 1.0, %v1468
    %v1470 = vtanh.pop %v1448
    %v1471 = vmul.f32 %v1467, %v1219
    %v1472 = vmul.f32 %v1465, %v1470
    %v1473 = vadd.f32 %v1471, %v1472
    %v1474 = vtanh.pop %v1473
    %v1475 = vmul.f32 %v1469, %v1474
    %1476 = vmatprep.subr.mxu0 0.0
    %1477 = vmatpush1.msra.mxu0 %v167
    %1478 = vmatprep.subr.mxu0 0.0
    %1479 = vmatpush1.msra.mxu0 %v166
    %1480 = vmatprep.subr.mxu0 0.0
    %1481 = vmatpush1.msra.mxu0 %v165
    %1482 = vmatprep.subr.mxu0 0.0
    %1483 = vmatpush1.msra.mxu0 %v164
    %1484 = vmatprep.subr.mxu0 0.0
    %1485 = vmatpush1.msra.mxu0 %v163
    %1486 = vmatprep.subr.mxu0 0.0
    %1487 = vmatpush1.msra.mxu0 %v162
    %1488 = vmatprep.subr.mxu0 0.0
    %1489 = vmatpush1.msra.mxu0 %v161
    %1490 = vmatprep.subr.mxu0 0.0
    %1491 = vmatpush1.msra.mxu0 %v160
    %1492 = vmatprep.subr.mxu0 0.0
    %1493 = vmatpush1.msra.mxu0 %v159
    %1494 = vmatprep.subr.mxu0 0.0
    %1495 = vmatpush1.msra.mxu0 %v158
    %1496 = vmatprep.subr.mxu0 0.0
    %1497 = vmatpush1.msra.mxu0 %v157
    %1498 = vmatprep.subr.mxu0 0.0
    %1499 = vmatpush1.msra.mxu0 %v156
    %1500 = vmatprep.subr.mxu0 0.0
    %1501 = vmatpush1.msra.mxu0 %v155
    %1502 = vmatprep.subr.mxu0 0.0
    %1503 = vmatpush1.msra.mxu0 %v154
    %1504 = vmatprep.subr.mxu0 0.0
    %1505 = vmatpush1.msra.mxu0 %v153
    %1506 = vmatprep.subr.mxu0 0.0
    %1507 = vmatpush1.msra.mxu0 %v152
    %1508 = vmatprep.subr.mxu0 0.0
    %1509 = vmatpush2.msra.mxu0 0.0
    %1510 = vmatprep.subr.mxu0 0.0
    %1511 = vmatpush2.msra.mxu0 0.0
    %1512 = vmatprep.subr.mxu0 0.0
    %1513 = vmatpush2.msra.mxu0 0.0
    %1514 = vmatprep.subr.mxu0 0.0
    %1515 = vmatpush2.msra.mxu0 0.0
    %1516 = vmatprep.subr.mxu0 0.0
    %1517 = vmatpush2.msra.mxu0 0.0
    %1518 = vmatprep.subr.mxu0 0.0
    %1519 = vmatpush2.msra.mxu0 0.0
    %1520 = vmatprep.subr.mxu0 0.0
    %1521 = vmatpush2.msra.mxu0 0.0
    %1522 = vmatprep.subr.mxu0 0.0
    %1523 = vmatpush2.msra.mxu0 0.0
    %1524 = vmatprep.subr.mxu0 0.0
    %1525 = vmatpush2.msra.mxu0 0.0
    %1526 = vmatprep.subr.mxu0 0.0
    %1527 = vmatpush2.msra.mxu0 0.0
    %1528 = vmatprep.subr.mxu0 0.0
    %1529 = vmatpush2.msra.mxu0 0.0
    %1530 = vmatprep.subr.mxu0 0.0
    %1531 = vmatpush2.msra.mxu0 0.0
    %1532 = vmatprep.subr.mxu0 0.0
    %1533 = vmatpush2.msra.mxu0 0.0
    %1534 = vmatprep.subr.mxu0 0.0
    %1535 = vmatpush2.msra.mxu0 0.0
    %1536 = vmatprep.subr.mxu0 0.0
    %1537 = vmatpush2.msra.mxu0 0.0
    %1538 = vmatprep.subr.mxu0 0.0
    %1539 = vmatpush2.msra.mxu0 0.0
    %1540 = vmatprep.mubr.f32.mxu0 0.0
    %1541 = vmatmul.mubr.f32.gmra.mxu0 %v1475
    %v1542 = vpop.f32.mrf.mxu0
    %v1543 = vadd.f32 %v459, %v1542
    %v1544 = vpop.f32.mrf.mxu0
    %1545 = vdwg.mxu0
    %s1546 = scalar_lea.vmem %s2, 32
    %v1547 = vld [vmem:[%s1546] sm:$0xff]
    %1549 = vrot.lane.b32.xlu0 %v1547, 4
    %v1550 = vpop.permute.xlu0 %1549
    %v1552 = vadd.f32 %v1543, %v1550
    %1554 = vrot.lane.b32.xlu0 %v1552, 124
    %v1555 = vpop.permute.xlu0 %1554
    %1558 = vrot.lane.b32.xlu0 %v1475, 64
    %v1559 = vpop.permute.xlu0 %1558
    %v1561 = vsel %vm264, %v1555, %v1559
    %v1562 = vsel %vm264, %v1559, 0
    %1564 = vmatprep.subr.mxu0 %v116
    %1565 = vmatpush1.msra.mxu0 %v115
    %1566 = vmatprep.subr.mxu0 %v112
    %1567 = vmatpush1.msra.mxu0 %v111
    %1568 = vmatprep.subr.mxu0 %v108
    %1569 = vmatpush1.msra.mxu0 %v107
    %1570 = vmatprep.subr.mxu0 %v104
    %1571 = vmatpush1.msra.mxu0 %v103
    %1572 = vmatprep.subr.mxu0 %v100
    %1573 = vmatpush1.msra.mxu0 %v99
    %1574 = vmatprep.subr.mxu0 %v96
    %1575 = vmatpush1.msra.mxu0 %v95
    %1576 = vmatprep.subr.mxu0 %v92
    %1577 = vmatpush1.msra.mxu0 %v91
    %1578 = vmatprep.subr.mxu0 %v88
    %1579 = vmatpush1.msra.mxu0 %v87
    %1580 = vmatprep.subr.mxu0 %v84
    %1581 = vmatpush1.msra.mxu0 %v83
    %1582 = vmatprep.subr.mxu0 %v80
    %1583 = vmatpush1.msra.mxu0 %v79
    %1584 = vmatprep.subr.mxu0 %v76
    %1585 = vmatpush1.msra.mxu0 %v75
    %1586 = vmatprep.subr.mxu0 %v72
    %1587 = vmatpush1.msra.mxu0 %v71
    %1588 = vmatprep.subr.mxu0 %v68
    %1589 = vmatpush1.msra.mxu0 %v67
    %1590 = vmatprep.subr.mxu0 %v64
    %1591 = vmatpush1.msra.mxu0 %v63
    %1592 = vmatprep.subr.mxu0 %v60
    %1593 = vmatpush1.msra.mxu0 %v59
    %1594 = vmatprep.subr.mxu0 %v56
    %1595 = vmatpush1.msra.mxu0 %v55
    %1596 = vmatprep.subr.mxu0 0.0
    %1597 = vmatpush2.msra.mxu0 0.0
    %1598 = vmatprep.subr.mxu0 0.0
    %1599 = vmatpush2.msra.mxu0 0.0
    %1600 = vmatprep.subr.mxu0 0.0
    %1601 = vmatpush2.msra.mxu0 0.0
    %1602 = vmatprep.subr.mxu0 0.0
    %1603 = vmatpush2.msra.mxu0 0.0
    %1604 = vmatprep.subr.mxu0 0.0
    %1605 = vmatpush2.msra.mxu0 0.0
    %1606 = vmatprep.subr.mxu0 0.0
    %1607 = vmatpush2.msra.mxu0 0.0
    %1608 = vmatprep.subr.mxu0 0.0
    %1609 = vmatpush2.msra.mxu0 0.0
    %1610 = vmatprep.subr.mxu0 0.0
    %1611 = vmatpush2.msra.mxu0 0.0
    %1612 = vmatprep.subr.mxu0 %v148
    %1613 = vmatpush2.msra.mxu0 %v147
    %1614 = vmatprep.subr.mxu0 %v144
    %1615 = vmatpush2.msra.mxu0 %v143
    %1616 = vmatprep.subr.mxu0 %v140
    %1617 = vmatpush2.msra.mxu0 %v139
    %1618 = vmatprep.subr.mxu0 %v136
    %1619 = vmatpush2.msra.mxu0 %v135
    %1620 = vmatprep.subr.mxu0 %v132
    %1621 = vmatpush2.msra.mxu0 %v131
    %1622 = vmatprep.subr.mxu0 %v128
    %1623 = vmatpush2.msra.mxu0 %v127
    %1624 = vmatprep.subr.mxu0 %v124
    %1625 = vmatpush2.msra.mxu0 %v123
    %1626 = vmatprep.subr.mxu0 %v120
    %1627 = vmatpush2.msra.mxu0 %v119
    %1628 = vmatprep.mubr.f32.mxu0 %v1562
    %1629 = vmatmul.mubr.f32.gmra.mxu0 %v1561
    %v1630 = vpop.f32.mrf.mxu0
    %v1631 = vadd.f32 %v270, %v1630
    %v1632 = vpop.f32.mrf.mxu0
    %v1633 = vadd.f32 %v274, %v1632
    %1634 = vdwg.mxu0
    %1635 = vmatprep.subr.mxu0 %v118
    %1636 = vmatpush1.msra.mxu0 %v117
    %1637 = vmatprep.subr.mxu0 %v114
    %1638 = vmatpush1.msra.mxu0 %v113
    %1639 = vmatprep.subr.mxu0 %v110
    %1640 = vmatpush1.msra.mxu0 %v109
    %1641 = vmatprep.subr.mxu0 %v106
    %1642 = vmatpush1.msra.mxu0 %v105
    %1643 = vmatprep.subr.mxu0 %v102
    %1644 = vmatpush1.msra.mxu0 %v101
    %1645 = vmatprep.subr.mxu0 %v98
    %1646 = vmatpush1.msra.mxu0 %v97
    %1647 = vmatprep.subr.mxu0 %v94
    %1648 = vmatpush1.msra.mxu0 %v93
    %1649 = vmatprep.subr.mxu0 %v90
    %1650 = vmatpush1.msra.mxu0 %v89
    %1651 = vmatprep.subr.mxu0 %v86
    %1652 = vmatpush1.msra.mxu0 %v85
    %1653 = vmatprep.subr.mxu0 %v82
    %1654 = vmatpush1.msra.mxu0 %v81
    %1655 = vmatprep.subr.mxu0 %v78
    %1656 = vmatpush1.msra.mxu0 %v77
    %1657 = vmatprep.subr.mxu0 %v74
    %1658 = vmatpush1.msra.mxu0 %v73
    %1659 = vmatprep.subr.mxu0 %v70
    %1660 = vmatpush1.msra.mxu0 %v69
    %1661 = vmatprep.subr.mxu0 %v66
    %1662 = vmatpush1.msra.mxu0 %v65
    %1663 = vmatprep.subr.mxu0 %v62
    %1664 = vmatpush1.msra.mxu0 %v61
    %1665 = vmatprep.subr.mxu0 %v58
    %1666 = vmatpush1.msra.mxu0 %v57
    %1667 = vmatprep.subr.mxu0 0.0
    %1668 = vmatpush2.msra.mxu0 0.0
    %1669 = vmatprep.subr.mxu0 0.0
    %1670 = vmatpush2.msra.mxu0 0.0
    %1671 = vmatprep.subr.mxu0 0.0
    %1672 = vmatpush2.msra.mxu0 0.0
    %1673 = vmatprep.subr.mxu0 0.0
    %1674 = vmatpush2.msra.mxu0 0.0
    %1675 = vmatprep.subr.mxu0 0.0
    %1676 = vmatpush2.msra.mxu0 0.0
    %1677 = vmatprep.subr.mxu0 0.0
    %1678 = vmatpush2.msra.mxu0 0.0
    %1679 = vmatprep.subr.mxu0 0.0
    %1680 = vmatpush2.msra.mxu0 0.0
    %1681 = vmatprep.subr.mxu0 0.0
    %1682 = vmatpush2.msra.mxu0 0.0
    %1683 = vmatprep.subr.mxu0 %v150
    %1684 = vmatpush2.msra.mxu0 %v149
    %1685 = vmatprep.subr.mxu0 %v146
    %1686 = vmatpush2.msra.mxu0 %v145
    %1687 = vmatprep.subr.mxu0 %v142
    %1688 = vmatpush2.msra.mxu0 %v141
    %1689 = vmatprep.subr.mxu0 %v138
    %1690 = vmatpush2.msra.mxu0 %v137
    %1691 = vmatprep.subr.mxu0 %v134
    %1692 = vmatpush2.msra.mxu0 %v133
    %1693 = vmatprep.subr.mxu0 %v130
    %1694 = vmatpush2.msra.mxu0 %v129
    %1695 = vmatprep.subr.mxu0 %v126
    %1696 = vmatpush2.msra.mxu0 %v125
    %1697 = vmatprep.subr.mxu0 %v122
    %1698 = vmatpush2.msra.mxu0 %v121
    %1699 = vmatprep.mubr.f32.mxu0 %v1562
    %1700 = vmatmul.mubr.f32.gmra.mxu0 %v1561
    %v1701 = vpop.f32.mrf.mxu0
    %v1702 = vadd.f32 %v278, %v1701
    %v1703 = vpop.f32.mrf.mxu0
    %v1704 = vadd.f32 %v282, %v1703
    %1705 = vdwg.mxu0
    %v1706 = vxor.u32 %v1631, 2147483648
    %v1707 = vxor.u32 %v1633, 2147483648
    %v1708 = vxor.u32 %v1704, 2147483648
    %v1709 = vmul.f32 %v1706, 1.442695
    %v1710 = vpow.pop %v1709
    %v1711 = vmul.f32 %v1707, 1.442695
    %v1712 = vpow.pop %v1711
    %v1713 = vmul.f32 %v1708, 1.442695
    %v1714 = vpow.pop %v1713
    %v1715 = vadd.f32 %v1710, 1.0
    %v1716 = vadd.f32 %v1712, 1.0
    %v1717 = vadd.f32 %v1714, 1.0
    %v1718 = vrcp.pop %v1715
    %v1719 = vmul.f32 1.0, %v1718
    %v1720 = vrcp.pop %v1716
    %v1721 = vmul.f32 1.0, %v1720
    %v1722 = vrcp.pop %v1717
    %v1723 = vmul.f32 1.0, %v1722
    %v1724 = vtanh.pop %v1702
    %v1725 = vmul.f32 %v1721, %v1473
    %v1726 = vmul.f32 %v1719, %v1724
    %v1727 = vadd.f32 %v1725, %v1726
    %v1728 = vtanh.pop %v1727
    %v1729 = vmul.f32 %v1723, %v1728
    %1730 = vmatprep.subr.mxu0 0.0
    %1731 = vmatpush1.msra.mxu0 %v167
    %1732 = vmatprep.subr.mxu0 0.0
    %1733 = vmatpush1.msra.mxu0 %v166
    %1734 = vmatprep.subr.mxu0 0.0
    %1735 = vmatpush1.msra.mxu0 %v165
    %1736 = vmatprep.subr.mxu0 0.0
    %1737 = vmatpush1.msra.mxu0 %v164
    %1738 = vmatprep.subr.mxu0 0.0
    %1739 = vmatpush1.msra.mxu0 %v163
    %1740 = vmatprep.subr.mxu0 0.0
    %1741 = vmatpush1.msra.mxu0 %v162
    %1742 = vmatprep.subr.mxu0 0.0
    %1743 = vmatpush1.msra.mxu0 %v161
    %1744 = vmatprep.subr.mxu0 0.0
    %1745 = vmatpush1.msra.mxu0 %v160
    %1746 = vmatprep.subr.mxu0 0.0
    %1747 = vmatpush1.msra.mxu0 %v159
    %1748 = vmatprep.subr.mxu0 0.0
    %1749 = vmatpush1.msra.mxu0 %v158
    %1750 = vmatprep.subr.mxu0 0.0
    %1751 = vmatpush1.msra.mxu0 %v157
    %1752 = vmatprep.subr.mxu0 0.0
    %1753 = vmatpush1.msra.mxu0 %v156
    %1754 = vmatprep.subr.mxu0 0.0
    %1755 = vmatpush1.msra.mxu0 %v155
    %1756 = vmatprep.subr.mxu0 0.0
    %1757 = vmatpush1.msra.mxu0 %v154
    %1758 = vmatprep.subr.mxu0 0.0
    %1759 = vmatpush1.msra.mxu0 %v153
    %1760 = vmatprep.subr.mxu0 0.0
    %1761 = vmatpush1.msra.mxu0 %v152
    %1762 = vmatprep.subr.mxu0 0.0
    %1763 = vmatpush2.msra.mxu0 0.0
    %1764 = vmatprep.subr.mxu0 0.0
    %1765 = vmatpush2.msra.mxu0 0.0
    %1766 = vmatprep.subr.mxu0 0.0
    %1767 = vmatpush2.msra.mxu0 0.0
    %1768 = vmatprep.subr.mxu0 0.0
    %1769 = vmatpush2.msra.mxu0 0.0
    %1770 = vmatprep.subr.mxu0 0.0
    %1771 = vmatpush2.msra.mxu0 0.0
    %1772 = vmatprep.subr.mxu0 0.0
    %1773 = vmatpush2.msra.mxu0 0.0
    %1774 = vmatprep.subr.mxu0 0.0
    %1775 = vmatpush2.msra.mxu0 0.0
    %1776 = vmatprep.subr.mxu0 0.0
    %1777 = vmatpush2.msra.mxu0 0.0
    %1778 = vmatprep.subr.mxu0 0.0
    %1779 = vmatpush2.msra.mxu0 0.0
    %1780 = vmatprep.subr.mxu0 0.0
    %1781 = vmatpush2.msra.mxu0 0.0
    %1782 = vmatprep.subr.mxu0 0.0
    %1783 = vmatpush2.msra.mxu0 0.0
    %1784 = vmatprep.subr.mxu0 0.0
    %1785 = vmatpush2.msra.mxu0 0.0
    %1786 = vmatprep.subr.mxu0 0.0
    %1787 = vmatpush2.msra.mxu0 0.0
    %1788 = vmatprep.subr.mxu0 0.0
    %1789 = vmatpush2.msra.mxu0 0.0
    %1790 = vmatprep.subr.mxu0 0.0
    %1791 = vmatpush2.msra.mxu0 0.0
    %1792 = vmatprep.subr.mxu0 0.0
    %1793 = vmatpush2.msra.mxu0 0.0
    %1794 = vmatprep.mubr.f32.mxu0 0.0
    %1795 = vmatmul.mubr.f32.gmra.mxu0 %v1729
    %v1796 = vpop.f32.mrf.mxu0
    %v1797 = vadd.f32 %v459, %v1796
    %v1798 = vpop.f32.mrf.mxu0
    %1799 = vdwg.mxu0
    %s1800 = scalar_lea.vmem %s2, 40
    %v1801 = vld [vmem:[%s1800] sm:$0xff]
    %1803 = vrot.lane.b32.xlu0 %v1801, 4
    %v1804 = vpop.permute.xlu0 %1803
    %v1806 = vadd.f32 %v1797, %v1804
    %1808 = vrot.lane.b32.xlu0 %v1806, 124
    %v1809 = vpop.permute.xlu0 %1808
    %1812 = vrot.lane.b32.xlu0 %v1729, 64
    %v1813 = vpop.permute.xlu0 %1812
    %v1815 = vsel %vm264, %v1809, %v1813
    %v1816 = vsel %vm264, %v1813, 0
    %1818 = vmatprep.subr.mxu0 %v116
    %1819 = vmatpush1.msra.mxu0 %v115
    %1820 = vmatprep.subr.mxu0 %v112
    %1821 = vmatpush1.msra.mxu0 %v111
    %1822 = vmatprep.subr.mxu0 %v108
    %1823 = vmatpush1.msra.mxu0 %v107
    %1824 = vmatprep.subr.mxu0 %v104
    %1825 = vmatpush1.msra.mxu0 %v103
    %1826 = vmatprep.subr.mxu0 %v100
    %1827 = vmatpush1.msra.mxu0 %v99
    %1828 = vmatprep.subr.mxu0 %v96
    %1829 = vmatpush1.msra.mxu0 %v95
    %1830 = vmatprep.subr.mxu0 %v92
    %1831 = vmatpush1.msra.mxu0 %v91
    %1832 = vmatprep.subr.mxu0 %v88
    %1833 = vmatpush1.msra.mxu0 %v87
    %1834 = vmatprep.subr.mxu0 %v84
    %1835 = vmatpush1.msra.mxu0 %v83
    %1836 = vmatprep.subr.mxu0 %v80
    %1837 = vmatpush1.msra.mxu0 %v79
    %1838 = vmatprep.subr.mxu0 %v76
    %1839 = vmatpush1.msra.mxu0 %v75
    %1840 = vmatprep.subr.mxu0 %v72
    %1841 = vmatpush1.msra.mxu0 %v71
    %1842 = vmatprep.subr.mxu0 %v68
    %1843 = vmatpush1.msra.mxu0 %v67
    %1844 = vmatprep.subr.mxu0 %v64
    %1845 = vmatpush1.msra.mxu0 %v63
    %1846 = vmatprep.subr.mxu0 %v60
    %1847 = vmatpush1.msra.mxu0 %v59
    %1848 = vmatprep.subr.mxu0 %v56
    %1849 = vmatpush1.msra.mxu0 %v55
    %1850 = vmatprep.subr.mxu0 0.0
    %1851 = vmatpush2.msra.mxu0 0.0
    %1852 = vmatprep.subr.mxu0 0.0
    %1853 = vmatpush2.msra.mxu0 0.0
    %1854 = vmatprep.subr.mxu0 0.0
    %1855 = vmatpush2.msra.mxu0 0.0
    %1856 = vmatprep.subr.mxu0 0.0
    %1857 = vmatpush2.msra.mxu0 0.0
    %1858 = vmatprep.subr.mxu0 0.0
    %1859 = vmatpush2.msra.mxu0 0.0
    %1860 = vmatprep.subr.mxu0 0.0
    %1861 = vmatpush2.msra.mxu0 0.0
    %1862 = vmatprep.subr.mxu0 0.0
    %1863 = vmatpush2.msra.mxu0 0.0
    %1864 = vmatprep.subr.mxu0 0.0
    %1865 = vmatpush2.msra.mxu0 0.0
    %1866 = vmatprep.subr.mxu0 %v148
    %1867 = vmatpush2.msra.mxu0 %v147
    %1868 = vmatprep.subr.mxu0 %v144
    %1869 = vmatpush2.msra.mxu0 %v143
    %1870 = vmatprep.subr.mxu0 %v140
    %1871 = vmatpush2.msra.mxu0 %v139
    %1872 = vmatprep.subr.mxu0 %v136
    %1873 = vmatpush2.msra.mxu0 %v135
    %1874 = vmatprep.subr.mxu0 %v132
    %1875 = vmatpush2.msra.mxu0 %v131
    %1876 = vmatprep.subr.mxu0 %v128
    %1877 = vmatpush2.msra.mxu0 %v127
    %1878 = vmatprep.subr.mxu0 %v124
    %1879 = vmatpush2.msra.mxu0 %v123
    %1880 = vmatprep.subr.mxu0 %v120
    %1881 = vmatpush2.msra.mxu0 %v119
    %1882 = vmatprep.mubr.f32.mxu0 %v1816
    %1883 = vmatmul.mubr.f32.gmra.mxu0 %v1815
    %v1884 = vpop.f32.mrf.mxu0
    %v1885 = vadd.f32 %v270, %v1884
    %v1886 = vpop.f32.mrf.mxu0
    %v1887 = vadd.f32 %v274, %v1886
    %1888 = vdwg.mxu0
    %1889 = vmatprep.subr.mxu0 %v118
    %1890 = vmatpush1.msra.mxu0 %v117
    %1891 = vmatprep.subr.mxu0 %v114
    %1892 = vmatpush1.msra.mxu0 %v113
    %1893 = vmatprep.subr.mxu0 %v110
    %1894 = vmatpush1.msra.mxu0 %v109
    %1895 = vmatprep.subr.mxu0 %v106
    %1896 = vmatpush1.msra.mxu0 %v105
    %1897 = vmatprep.subr.mxu0 %v102
    %1898 = vmatpush1.msra.mxu0 %v101
    %1899 = vmatprep.subr.mxu0 %v98
    %1900 = vmatpush1.msra.mxu0 %v97
    %1901 = vmatprep.subr.mxu0 %v94
    %1902 = vmatpush1.msra.mxu0 %v93
    %1903 = vmatprep.subr.mxu0 %v90
    %1904 = vmatpush1.msra.mxu0 %v89
    %1905 = vmatprep.subr.mxu0 %v86
    %1906 = vmatpush1.msra.mxu0 %v85
    %1907 = vmatprep.subr.mxu0 %v82
    %1908 = vmatpush1.msra.mxu0 %v81
    %1909 = vmatprep.subr.mxu0 %v78
    %1910 = vmatpush1.msra.mxu0 %v77
    %1911 = vmatprep.subr.mxu0 %v74
    %1912 = vmatpush1.msra.mxu0 %v73
    %1913 = vmatprep.subr.mxu0 %v70
    %1914 = vmatpush1.msra.mxu0 %v69
    %1915 = vmatprep.subr.mxu0 %v66
    %1916 = vmatpush1.msra.mxu0 %v65
    %1917 = vmatprep.subr.mxu0 %v62
    %1918 = vmatpush1.msra.mxu0 %v61
    %1919 = vmatprep.subr.mxu0 %v58
    %1920 = vmatpush1.msra.mxu0 %v57
    %1921 = vmatprep.subr.mxu0 0.0
    %1922 = vmatpush2.msra.mxu0 0.0
    %1923 = vmatprep.subr.mxu0 0.0
    %1924 = vmatpush2.msra.mxu0 0.0
    %1925 = vmatprep.subr.mxu0 0.0
    %1926 = vmatpush2.msra.mxu0 0.0
    %1927 = vmatprep.subr.mxu0 0.0
    %1928 = vmatpush2.msra.mxu0 0.0
    %1929 = vmatprep.subr.mxu0 0.0
    %1930 = vmatpush2.msra.mxu0 0.0
    %1931 = vmatprep.subr.mxu0 0.0
    %1932 = vmatpush2.msra.mxu0 0.0
    %1933 = vmatprep.subr.mxu0 0.0
    %1934 = vmatpush2.msra.mxu0 0.0
    %1935 = vmatprep.subr.mxu0 0.0
    %1936 = vmatpush2.msra.mxu0 0.0
    %1937 = vmatprep.subr.mxu0 %v150
    %1938 = vmatpush2.msra.mxu0 %v149
    %1939 = vmatprep.subr.mxu0 %v146
    %1940 = vmatpush2.msra.mxu0 %v145
    %1941 = vmatprep.subr.mxu0 %v142
    %1942 = vmatpush2.msra.mxu0 %v141
    %1943 = vmatprep.subr.mxu0 %v138
    %1944 = vmatpush2.msra.mxu0 %v137
    %1945 = vmatprep.subr.mxu0 %v134
    %1946 = vmatpush2.msra.mxu0 %v133
    %1947 = vmatprep.subr.mxu0 %v130
    %1948 = vmatpush2.msra.mxu0 %v129
    %1949 = vmatprep.subr.mxu0 %v126
    %1950 = vmatpush2.msra.mxu0 %v125
    %1951 = vmatprep.subr.mxu0 %v122
    %1952 = vmatpush2.msra.mxu0 %v121
    %1953 = vmatprep.mubr.f32.mxu0 %v1816
    %1954 = vmatmul.mubr.f32.gmra.mxu0 %v1815
    %v1955 = vpop.f32.mrf.mxu0
    %v1956 = vadd.f32 %v278, %v1955
    %v1957 = vpop.f32.mrf.mxu0
    %v1958 = vadd.f32 %v282, %v1957
    %1959 = vdwg.mxu0
    %v1960 = vxor.u32 %v1885, 2147483648
    %v1961 = vxor.u32 %v1887, 2147483648
    %v1962 = vxor.u32 %v1958, 2147483648
    %v1963 = vmul.f32 %v1960, 1.442695
    %v1964 = vpow.pop %v1963
    %v1965 = vmul.f32 %v1961, 1.442695
    %v1966 = vpow.pop %v1965
    %v1967 = vmul.f32 %v1962, 1.442695
    %v1968 = vpow.pop %v1967
    %v1969 = vadd.f32 %v1964, 1.0
    %v1970 = vadd.f32 %v1966, 1.0
    %v1971 = vadd.f32 %v1968, 1.0
    %v1972 = vrcp.pop %v1969
    %v1973 = vmul.f32 1.0, %v1972
    %v1974 = vrcp.pop %v1970
    %v1975 = vmul.f32 1.0, %v1974
    %v1976 = vrcp.pop %v1971
    %v1977 = vmul.f32 1.0, %v1976
    %v1978 = vtanh.pop %v1956
    %v1979 = vmul.f32 %v1975, %v1727
    %v1980 = vmul.f32 %v1973, %v1978
    %v1981 = vadd.f32 %v1979, %v1980
    %v1982 = vtanh.pop %v1981
    %v1983 = vmul.f32 %v1977, %v1982
    %1984 = vmatprep.subr.mxu0 0.0
    %1985 = vmatpush1.msra.mxu0 %v167
    %1986 = vmatprep.subr.mxu0 0.0
    %1987 = vmatpush1.msra.mxu0 %v166
    %1988 = vmatprep.subr.mxu0 0.0
    %1989 = vmatpush1.msra.mxu0 %v165
    %1990 = vmatprep.subr.mxu0 0.0
    %1991 = vmatpush1.msra.mxu0 %v164
    %1992 = vmatprep.subr.mxu0 0.0
    %1993 = vmatpush1.msra.mxu0 %v163
    %1994 = vmatprep.subr.mxu0 0.0
    %1995 = vmatpush1.msra.mxu0 %v162
    %1996 = vmatprep.subr.mxu0 0.0
    %1997 = vmatpush1.msra.mxu0 %v161
    %1998 = vmatprep.subr.mxu0 0.0
    %1999 = vmatpush1.msra.mxu0 %v160
    %2000 = vmatprep.subr.mxu0 0.0
    %2001 = vmatpush1.msra.mxu0 %v159
    %2002 = vmatprep.subr.mxu0 0.0
    %2003 = vmatpush1.msra.mxu0 %v158
    %2004 = vmatprep.subr.mxu0 0.0
    %2005 = vmatpush1.msra.mxu0 %v157
    %2006 = vmatprep.subr.mxu0 0.0
    %2007 = vmatpush1.msra.mxu0 %v156
    %2008 = vmatprep.subr.mxu0 0.0
    %2009 = vmatpush1.msra.mxu0 %v155
    %2010 = vmatprep.subr.mxu0 0.0
    %2011 = vmatpush1.msra.mxu0 %v154
    %2012 = vmatprep.subr.mxu0 0.0
    %2013 = vmatpush1.msra.mxu0 %v153
    %2014 = vmatprep.subr.mxu0 0.0
    %2015 = vmatpush1.msra.mxu0 %v152
    %2016 = vmatprep.subr.mxu0 0.0
    %2017 = vmatpush2.msra.mxu0 0.0
    %2018 = vmatprep.subr.mxu0 0.0
    %2019 = vmatpush2.msra.mxu0 0.0
    %2020 = vmatprep.subr.mxu0 0.0
    %2021 = vmatpush2.msra.mxu0 0.0
    %2022 = vmatprep.subr.mxu0 0.0
    %2023 = vmatpush2.msra.mxu0 0.0
    %2024 = vmatprep.subr.mxu0 0.0
    %2025 = vmatpush2.msra.mxu0 0.0
    %2026 = vmatprep.subr.mxu0 0.0
    %2027 = vmatpush2.msra.mxu0 0.0
    %2028 = vmatprep.subr.mxu0 0.0
    %2029 = vmatpush2.msra.mxu0 0.0
    %2030 = vmatprep.subr.mxu0 0.0
    %2031 = vmatpush2.msra.mxu0 0.0
    %2032 = vmatprep.subr.mxu0 0.0
    %2033 = vmatpush2.msra.mxu0 0.0
    %2034 = vmatprep.subr.mxu0 0.0
    %2035 = vmatpush2.msra.mxu0 0.0
    %2036 = vmatprep.subr.mxu0 0.0
    %2037 = vmatpush2.msra.mxu0 0.0
    %2038 = vmatprep.subr.mxu0 0.0
    %2039 = vmatpush2.msra.mxu0 0.0
    %2040 = vmatprep.subr.mxu0 0.0
    %2041 = vmatpush2.msra.mxu0 0.0
    %2042 = vmatprep.subr.mxu0 0.0
    %2043 = vmatpush2.msra.mxu0 0.0
    %2044 = vmatprep.subr.mxu0 0.0
    %2045 = vmatpush2.msra.mxu0 0.0
    %2046 = vmatprep.subr.mxu0 0.0
    %2047 = vmatpush2.msra.mxu0 0.0
    %2048 = vmatprep.mubr.f32.mxu0 0.0
    %2049 = vmatmul.mubr.f32.gmra.mxu0 %v1983
    %v2050 = vpop.f32.mrf.mxu0
    %v2051 = vadd.f32 %v459, %v2050
    %v2052 = vpop.f32.mrf.mxu0
    %2053 = vdwg.mxu0
    %s2054 = scalar_lea.vmem %s2, 48
    %v2055 = vld [vmem:[%s2054] sm:$0xff]
    %2057 = vrot.lane.b32.xlu0 %v2055, 4
    %v2058 = vpop.permute.xlu0 %2057
    %v2060 = vadd.f32 %v2051, %v2058
    %2062 = vrot.lane.b32.xlu0 %v2060, 124
    %v2063 = vpop.permute.xlu0 %2062
    %2066 = vrot.lane.b32.xlu0 %v1983, 64
    %v2067 = vpop.permute.xlu0 %2066
    %v2069 = vsel %vm264, %v2063, %v2067
    %v2070 = vsel %vm264, %v2067, 0
    %2072 = vmatprep.subr.mxu0 %v116
    %2073 = vmatpush1.msra.mxu0 %v115
    %2074 = vmatprep.subr.mxu0 %v112
    %2075 = vmatpush1.msra.mxu0 %v111
    %2076 = vmatprep.subr.mxu0 %v108
    %2077 = vmatpush1.msra.mxu0 %v107
    %2078 = vmatprep.subr.mxu0 %v104
    %2079 = vmatpush1.msra.mxu0 %v103
    %2080 = vmatprep.subr.mxu0 %v100
    %2081 = vmatpush1.msra.mxu0 %v99
    %2082 = vmatprep.subr.mxu0 %v96
    %2083 = vmatpush1.msra.mxu0 %v95
    %2084 = vmatprep.subr.mxu0 %v92
    %2085 = vmatpush1.msra.mxu0 %v91
    %2086 = vmatprep.subr.mxu0 %v88
    %2087 = vmatpush1.msra.mxu0 %v87
    %2088 = vmatprep.subr.mxu0 %v84
    %2089 = vmatpush1.msra.mxu0 %v83
    %2090 = vmatprep.subr.mxu0 %v80
    %2091 = vmatpush1.msra.mxu0 %v79
    %2092 = vmatprep.subr.mxu0 %v76
    %2093 = vmatpush1.msra.mxu0 %v75
    %2094 = vmatprep.subr.mxu0 %v72
    %2095 = vmatpush1.msra.mxu0 %v71
    %2096 = vmatprep.subr.mxu0 %v68
    %2097 = vmatpush1.msra.mxu0 %v67
    %2098 = vmatprep.subr.mxu0 %v64
    %2099 = vmatpush1.msra.mxu0 %v63
    %2100 = vmatprep.subr.mxu0 %v60
    %2101 = vmatpush1.msra.mxu0 %v59
    %2102 = vmatprep.subr.mxu0 %v56
    %2103 = vmatpush1.msra.mxu0 %v55
    %2104 = vmatprep.subr.mxu0 0.0
    %2105 = vmatpush2.msra.mxu0 0.0
    %2106 = vmatprep.subr.mxu0 0.0
    %2107 = vmatpush2.msra.mxu0 0.0
    %2108 = vmatprep.subr.mxu0 0.0
    %2109 = vmatpush2.msra.mxu0 0.0
    %2110 = vmatprep.subr.mxu0 0.0
    %2111 = vmatpush2.msra.mxu0 0.0
    %2112 = vmatprep.subr.mxu0 0.0
    %2113 = vmatpush2.msra.mxu0 0.0
    %2114 = vmatprep.subr.mxu0 0.0
    %2115 = vmatpush2.msra.mxu0 0.0
    %2116 = vmatprep.subr.mxu0 0.0
    %2117 = vmatpush2.msra.mxu0 0.0
    %2118 = vmatprep.subr.mxu0 0.0
    %2119 = vmatpush2.msra.mxu0 0.0
    %2120 = vmatprep.subr.mxu0 %v148
    %2121 = vmatpush2.msra.mxu0 %v147
    %2122 = vmatprep.subr.mxu0 %v144
    %2123 = vmatpush2.msra.mxu0 %v143
    %2124 = vmatprep.subr.mxu0 %v140
    %2125 = vmatpush2.msra.mxu0 %v139
    %2126 = vmatprep.subr.mxu0 %v136
    %2127 = vmatpush2.msra.mxu0 %v135
    %2128 = vmatprep.subr.mxu0 %v132
    %2129 = vmatpush2.msra.mxu0 %v131
    %2130 = vmatprep.subr.mxu0 %v128
    %2131 = vmatpush2.msra.mxu0 %v127
    %2132 = vmatprep.subr.mxu0 %v124
    %2133 = vmatpush2.msra.mxu0 %v123
    %2134 = vmatprep.subr.mxu0 %v120
    %2135 = vmatpush2.msra.mxu0 %v119
    %2136 = vmatprep.mubr.f32.mxu0 %v2070
    %2137 = vmatmul.mubr.f32.gmra.mxu0 %v2069
    %v2138 = vpop.f32.mrf.mxu0
    %v2139 = vadd.f32 %v270, %v2138
    %v2140 = vpop.f32.mrf.mxu0
    %v2141 = vadd.f32 %v274, %v2140
    %2142 = vdwg.mxu0
    %2143 = vmatprep.subr.mxu0 %v118
    %2144 = vmatpush1.msra.mxu0 %v117
    %2145 = vmatprep.subr.mxu0 %v114
    %2146 = vmatpush1.msra.mxu0 %v113
    %2147 = vmatprep.subr.mxu0 %v110
    %2148 = vmatpush1.msra.mxu0 %v109
    %2149 = vmatprep.subr.mxu0 %v106
    %2150 = vmatpush1.msra.mxu0 %v105
    %2151 = vmatprep.subr.mxu0 %v102
    %2152 = vmatpush1.msra.mxu0 %v101
    %2153 = vmatprep.subr.mxu0 %v98
    %2154 = vmatpush1.msra.mxu0 %v97
    %2155 = vmatprep.subr.mxu0 %v94
    %2156 = vmatpush1.msra.mxu0 %v93
    %2157 = vmatprep.subr.mxu0 %v90
    %2158 = vmatpush1.msra.mxu0 %v89
    %2159 = vmatprep.subr.mxu0 %v86
    %2160 = vmatpush1.msra.mxu0 %v85
    %2161 = vmatprep.subr.mxu0 %v82
    %2162 = vmatpush1.msra.mxu0 %v81
    %2163 = vmatprep.subr.mxu0 %v78
    %2164 = vmatpush1.msra.mxu0 %v77
    %2165 = vmatprep.subr.mxu0 %v74
    %2166 = vmatpush1.msra.mxu0 %v73
    %2167 = vmatprep.subr.mxu0 %v70
    %2168 = vmatpush1.msra.mxu0 %v69
    %2169 = vmatprep.subr.mxu0 %v66
    %2170 = vmatpush1.msra.mxu0 %v65
    %2171 = vmatprep.subr.mxu0 %v62
    %2172 = vmatpush1.msra.mxu0 %v61
    %2173 = vmatprep.subr.mxu0 %v58
    %2174 = vmatpush1.msra.mxu0 %v57
    %2175 = vmatprep.subr.mxu0 0.0
    %2176 = vmatpush2.msra.mxu0 0.0
    %2177 = vmatprep.subr.mxu0 0.0
    %2178 = vmatpush2.msra.mxu0 0.0
    %2179 = vmatprep.subr.mxu0 0.0
    %2180 = vmatpush2.msra.mxu0 0.0
    %2181 = vmatprep.subr.mxu0 0.0
    %2182 = vmatpush2.msra.mxu0 0.0
    %2183 = vmatprep.subr.mxu0 0.0
    %2184 = vmatpush2.msra.mxu0 0.0
    %2185 = vmatprep.subr.mxu0 0.0
    %2186 = vmatpush2.msra.mxu0 0.0
    %2187 = vmatprep.subr.mxu0 0.0
    %2188 = vmatpush2.msra.mxu0 0.0
    %2189 = vmatprep.subr.mxu0 0.0
    %2190 = vmatpush2.msra.mxu0 0.0
    %2191 = vmatprep.subr.mxu0 %v150
    %2192 = vmatpush2.msra.mxu0 %v149
    %2193 = vmatprep.subr.mxu0 %v146
    %2194 = vmatpush2.msra.mxu0 %v145
    %2195 = vmatprep.subr.mxu0 %v142
    %2196 = vmatpush2.msra.mxu0 %v141
    %2197 = vmatprep.subr.mxu0 %v138
    %2198 = vmatpush2.msra.mxu0 %v137
    %2199 = vmatprep.subr.mxu0 %v134
    %2200 = vmatpush2.msra.mxu0 %v133
    %2201 = vmatprep.subr.mxu0 %v130
    %2202 = vmatpush2.msra.mxu0 %v129
    %2203 = vmatprep.subr.mxu0 %v126
    %2204 = vmatpush2.msra.mxu0 %v125
    %2205 = vmatprep.subr.mxu0 %v122
    %2206 = vmatpush2.msra.mxu0 %v121
    %2207 = vmatprep.mubr.f32.mxu0 %v2070
    %2208 = vmatmul.mubr.f32.gmra.mxu0 %v2069
    %v2209 = vpop.f32.mrf.mxu0
    %v2210 = vadd.f32 %v278, %v2209
    %v2211 = vpop.f32.mrf.mxu0
    %v2212 = vadd.f32 %v282, %v2211
    %2213 = vdwg.mxu0
    %v2214 = vxor.u32 %v2139, 2147483648
    %v2215 = vxor.u32 %v2141, 2147483648
    %v2216 = vxor.u32 %v2212, 2147483648
    %v2217 = vmul.f32 %v2214, 1.442695
    %v2218 = vpow.pop %v2217
    %v2219 = vmul.f32 %v2215, 1.442695
    %v2220 = vpow.pop %v2219
    %v2221 = vmul.f32 %v2216, 1.442695
    %v2222 = vpow.pop %v2221
    %v2223 = vadd.f32 %v2218, 1.0
    %v2224 = vadd.f32 %v2220, 1.0
    %v2225 = vadd.f32 %v2222, 1.0
    %v2226 = vrcp.pop %v2223
    %v2227 = vmul.f32 1.0, %v2226
    %v2228 = vrcp.pop %v2224
    %v2229 = vmul.f32 1.0, %v2228
    %v2230 = vrcp.pop %v2225
    %v2231 = vmul.f32 1.0, %v2230
    %v2232 = vtanh.pop %v2210
    %v2233 = vmul.f32 %v2229, %v1981
    %v2234 = vmul.f32 %v2227, %v2232
    %v2235 = vadd.f32 %v2233, %v2234
    %v2236 = vtanh.pop %v2235
    %v2237 = vmul.f32 %v2231, %v2236
    %2238 = vmatprep.subr.mxu0 0.0
    %2239 = vmatpush1.msra.mxu0 %v167
    %2240 = vmatprep.subr.mxu0 0.0
    %2241 = vmatpush1.msra.mxu0 %v166
    %2242 = vmatprep.subr.mxu0 0.0
    %2243 = vmatpush1.msra.mxu0 %v165
    %2244 = vmatprep.subr.mxu0 0.0
    %2245 = vmatpush1.msra.mxu0 %v164
    %2246 = vmatprep.subr.mxu0 0.0
    %2247 = vmatpush1.msra.mxu0 %v163
    %2248 = vmatprep.subr.mxu0 0.0
    %2249 = vmatpush1.msra.mxu0 %v162
    %2250 = vmatprep.subr.mxu0 0.0
    %2251 = vmatpush1.msra.mxu0 %v161
    %2252 = vmatprep.subr.mxu0 0.0
    %2253 = vmatpush1.msra.mxu0 %v160
    %2254 = vmatprep.subr.mxu0 0.0
    %2255 = vmatpush1.msra.mxu0 %v159
    %2256 = vmatprep.subr.mxu0 0.0
    %2257 = vmatpush1.msra.mxu0 %v158
    %2258 = vmatprep.subr.mxu0 0.0
    %2259 = vmatpush1.msra.mxu0 %v157
    %2260 = vmatprep.subr.mxu0 0.0
    %2261 = vmatpush1.msra.mxu0 %v156
    %2262 = vmatprep.subr.mxu0 0.0
    %2263 = vmatpush1.msra.mxu0 %v155
    %2264 = vmatprep.subr.mxu0 0.0
    %2265 = vmatpush1.msra.mxu0 %v154
    %2266 = vmatprep.subr.mxu0 0.0
    %2267 = vmatpush1.msra.mxu0 %v153
    %2268 = vmatprep.subr.mxu0 0.0
    %2269 = vmatpush1.msra.mxu0 %v152
    %2270 = vmatprep.subr.mxu0 0.0
    %2271 = vmatpush2.msra.mxu0 0.0
    %2272 = vmatprep.subr.mxu0 0.0
    %2273 = vmatpush2.msra.mxu0 0.0
    %2274 = vmatprep.subr.mxu0 0.0
    %2275 = vmatpush2.msra.mxu0 0.0
    %2276 = vmatprep.subr.mxu0 0.0
    %2277 = vmatpush2.msra.mxu0 0.0
    %2278 = vmatprep.subr.mxu0 0.0
    %2279 = vmatpush2.msra.mxu0 0.0
    %2280 = vmatprep.subr.mxu0 0.0
    %2281 = vmatpush2.msra.mxu0 0.0
    %2282 = vmatprep.subr.mxu0 0.0
    %2283 = vmatpush2.msra.mxu0 0.0
    %2284 = vmatprep.subr.mxu0 0.0
    %2285 = vmatpush2.msra.mxu0 0.0
    %2286 = vmatprep.subr.mxu0 0.0
    %2287 = vmatpush2.msra.mxu0 0.0
    %2288 = vmatprep.subr.mxu0 0.0
    %2289 = vmatpush2.msra.mxu0 0.0
    %2290 = vmatprep.subr.mxu0 0.0
    %2291 = vmatpush2.msra.mxu0 0.0
    %2292 = vmatprep.subr.mxu0 0.0
    %2293 = vmatpush2.msra.mxu0 0.0
    %2294 = vmatprep.subr.mxu0 0.0
    %2295 = vmatpush2.msra.mxu0 0.0
    %2296 = vmatprep.subr.mxu0 0.0
    %2297 = vmatpush2.msra.mxu0 0.0
    %2298 = vmatprep.subr.mxu0 0.0
    %2299 = vmatpush2.msra.mxu0 0.0
    %2300 = vmatprep.subr.mxu0 0.0
    %2301 = vmatpush2.msra.mxu0 0.0
    %2302 = vmatprep.mubr.f32.mxu0 0.0
    %2303 = vmatmul.mubr.f32.gmra.mxu0 %v2237
    %v2304 = vpop.f32.mrf.mxu0
    %v2305 = vadd.f32 %v459, %v2304
    %v2306 = vpop.f32.mrf.mxu0
    %2307 = vdwg.mxu0
    %2308 = vst.msk [vmem:[%s11] sm:$0xff] %vm178, %v528
    %2309 = vst.msk [vmem:[%s11 + $0x8] sm:$0xff] %vm178, %v781
    %2310 = vst.msk [vmem:[%s11 + $0x10] sm:$0xff] %vm178, %v1035
    %2311 = vst.msk [vmem:[%s11 + $0x18] sm:$0xff] %vm178, %v1289
    %2312 = vst.msk [vmem:[%s11 + $0x20] sm:$0xff] %vm178, %v1543
    %2313 = vst.msk [vmem:[%s11 + $0x28] sm:$0xff] %vm178, %v1797
    %2314 = vst.msk [vmem:[%s11 + $0x30] sm:$0xff] %vm178, %v2051
    %2315 = vst.msk [vmem:[%s11 + $0x38] sm:$0xff] %vm178, %v2305
    %2316 = vst [vmem:[#allocation5] sm:$0xff] %v2237
    // Predicated region
    $region50: #{tpu_custom_call.1} parent=1 // pred_check
      _
    $region51: #{tpu_custom_call.1} parent=1 // pred_check_branch
      %2318 = sbr.rel (0) target = $region53
    $region52: #{tpu_custom_call.1} parent=1 // pred_region
      _
    $region53: #{tpu_custom_call.1} parent=1 // pred_fallthru
      _
    // Predicated region
    $region54: #{tpu_custom_call.1} parent=1 // pred_check
      _
    $region55: #{tpu_custom_call.1} parent=1 // pred_check_branch
      %2320 = sbr.rel (0) target = $region57
    $region56: #{tpu_custom_call.1} parent=1 // pred_region
      %s2322 = ssub.s32 128, 128
      %2323 = vsyncadd [#allocation4], %s2322
      %s2325 = sshll.u32 [#allocation5], 4
      %s2326 = int_to_ptr.vmem [resolvable:$true] %s2325
      %2328 = dma.vmem_to_hbm [thread:$0]  %s2326, 128, %s12, [#allocation4]
    $region57: #{tpu_custom_call.1} parent=1 // pred_fallthru
      _
    // Predicated region
    $region58: #{tpu_custom_call.1} parent=1 // pred_check
      _
    $region59: #{tpu_custom_call.1} parent=1 // pred_check_branch
      %2330 = sbr.rel (0) target = $region61
    $region60: #{tpu_custom_call.1} parent=1 // pred_region
      _
    $region61: #{tpu_custom_call.1} parent=1 // pred_fallthru
      _
    // Predicated region
    $region62: #{tpu_custom_call.1} parent=1 // pred_check
      _
    $region63: #{tpu_custom_call.1} parent=1 // pred_check_branch
      %2332 = sbr.rel (0) target = $region65
    $region64: #{tpu_custom_call.1} parent=1 // pred_region
      %2333 = dma.done [#allocation4], 128
    $region65: #{tpu_custom_call.1} parent=1 // pred_fallthru
      _
    %2334 = vsyncpa [#allocation3], 1
    %2335 = vsyncpa [#allocation4], 1

</llo_original>
